<compile_context>
chip_gen: v7x
topology: tpu7x:2x2x1
jax: 0.10.0
libtpu: 0.0.40
codegen_flags: <defaults>
</compile_context>

<pallas_src>
import functools

import numpy as np
import jax
import jax.numpy as jnp
from jax.experimental import pallas as pl
from jax.experimental.pallas import tpu as pltpu


# ---------------------------------------------------------------------------
# helpers mirroring the PyTorch shape arithmetic
# ---------------------------------------------------------------------------
def get_conv_shape(shape, kernel_size):
    return (shape[0] * 2, shape[1] - (kernel_size - 1), shape[2] - (kernel_size - 1))


def get_pool_shape(shape):
    return (shape[0], shape[1] / 2, shape[2] / 2)


def dense_arg(channels, width, height, kernel_size):
    x = (channels, width, height)
    x = get_conv_shape(x, kernel_size)
    x = get_pool_shape(x)
    x = get_conv_shape(x, kernel_size)
    x = get_pool_shape(x)
    return int(x[0] * x[1] * x[2])


FPAD = 128  # lane-padded width for all MLP layers / logits


# ---------------------------------------------------------------------------
# The single fused kernel
# ---------------------------------------------------------------------------
def _fused_cnn_kernel(p1t_ref, w1t_ref, b1_ref, s1_ref, t1_ref,
                      w2t_ref, b2_ref, s2_ref, t2_ref, psel_ref,
                      w_fc1_ref, b_fc1_ref, w_fc2_ref, b_fc2_ref,
                      w_fc3_ref, b_fc3_ref, o_ref,
                      *, B, K, C2, C4, G1, OH2):
    f32 = jnp.float32
    nb = B * G1 * G1                     # columns per pool1-parity block (b,ph,pw)

    # ---- conv1 + bias + ReLU + BN1: ONE matmul, lane-dense (C2, 4*nb) acc ----
    acc1 = jnp.dot(w1t_ref[...], p1t_ref[...], preferred_element_type=f32)
    y1 = jnp.maximum(acc1 + b1_ref[...], 0.0) * s1_ref[...] + t1_ref[...]

    # ---- pool1: columns are parity-major, so 2x2 max-pool = max of 4 blocks ----
    p1 = jnp.maximum(jnp.maximum(y1[:, 0 * nb:1 * nb], y1[:, 1 * nb:2 * nb]),
                     jnp.maximum(y1[:, 2 * nb:3 * nb], y1[:, 3 * nb:4 * nb]))
    # p1: (C2, nb), column = b*G1*G1 + ph*G1 + pw  (pooled1 on the G1 x G1 grid)

    # ---- conv2 im2col built in-kernel via lane shifts on the flattened grid ----
    # patch row block (kh,kw) = p1 shifted left by kh*G1+kw; only output columns
    # with oh2<OH2 and ow2<OH2 are valid (others are garbage and discarded by
    # the selection matmul below, which has zero weights there).
    max_shift = (K - 1) * G1 + (K - 1)
    p1p = jnp.concatenate([p1, jnp.zeros((C2, max_shift), f32)], axis=1)
    rows = [p1p[:, kh * G1 + kw: kh * G1 + kw + nb]
            for kh in range(K) for kw in range(K)]
    p2t = jnp.concatenate(rows, axis=0)                       # (K*K*C2, nb)
    acc2 = jnp.dot(w2t_ref[...], p2t, preferred_element_type=f32)   # (C4, nb)
    y2 = jnp.maximum(acc2 + b2_ref[...], 0.0) * s2_ref[...] + t2_ref[...]

    # ---- pool2 + crop to valid OH2 x OH2 region via constant 0/1 selection ----
    z = jnp.dot(y2, psel_ref[...], preferred_element_type=f32)  # (C4, 4*B*P2*P2)
    q = B * (OH2 // 2) * (OH2 // 2)
    pooled2 = jnp.maximum(jnp.maximum(z[:, 0 * q:1 * q], z[:, 1 * q:2 * q]),
                          jnp.maximum(z[:, 2 * q:3 * q], z[:, 3 * q:4 * q]))
    # pooled2: (C4, B*P2*P2), column = b*P2*P2 + ph2*P2 + pw2

    # ---- flatten to (B, C4*P2*P2) in torch flatten (c, h, w) order ----
    per_b = (OH2 // 2) * (OH2 // 2)
    brows = []
    for b in range(B):
        pieces = [pooled2[c:c + 1, b * per_b:(b + 1) * per_b] for c in range(C4)]
        brows.append(jnp.concatenate(pieces, axis=1))          # (1, C4*per_b)
    flat = jnp.concatenate(brows, axis=0)                      # (B, C4*per_b)

    # ---- MLP (all widths lane-padded to 128) + softmax(dim=1) ----
    h1 = jnp.maximum(jnp.dot(flat, w_fc1_ref[...], preferred_element_type=f32)
                     + b_fc1_ref[...], 0.0)
    h2 = jnp.maximum(jnp.dot(h1, w_fc2_ref[...], preferred_element_type=f32)
                     + b_fc2_ref[...], 0.0)
    logits = jnp.dot(h2, w_fc3_ref[...], preferred_element_type=f32) + b_fc3_ref[...]
    m = jnp.max(logits, axis=-1, keepdims=True)
    e = jnp.exp(logits - m)                                    # padded lanes -> 0
    denom = jnp.sum(e, axis=-1, keepdims=True)
    o_ref[...] = e * pl.reciprocal(denom, approx=True)


# ---------------------------------------------------------------------------
# Wrapper-side input layout plumbing (runs on the 25 KB input, inside jit)
# ---------------------------------------------------------------------------
def _conv1_patches(x_nchw, K):
    """Transposed im2col of the input, columns grouped by pool1 parity.

    Row    index: (kh*K + kw)*Cin + ci
    Column index: ((dh*2 + dw)*B + b)*PH*PW + ph*PW + pw,  oh=2ph+dh, ow=2pw+dw
    """
    B, Cin, H, W = x_nchw.shape
    OH, OW = H - K + 1, W - K + 1
    PH, PW = OH // 2, OW // 2
    blocks = []
    for kh in range(K):
        for kw in range(K):
            v = x_nchw[:, :, kh:kh + OH, kw:kw + OW]          # (B,Cin,OH,OW)
            v = v.reshape(B, Cin, PH, 2, PW, 2)               # oh=2ph+dh, ow=2pw+dw
            v = jnp.transpose(v, (1, 3, 5, 0, 2, 4))          # (Cin,dh,dw,B,PH,PW)
            blocks.append(v.reshape(Cin, 4 * B * PH * PW))
    return jnp.concatenate(blocks, axis=0)                    # (K*K*Cin, 4*B*PH*PW)


def _pool2_selector(B, G1, OH2):
    """Constant 0/1 matrix: y2 columns (b*G1*G1 + oh2*G1 + ow2) ->
    parity-major pooled2 candidates ((eh*2+ew)*B + b)*P2*P2 + ph2*P2 + pw2."""
    P2 = OH2 // 2
    S = np.zeros((B * G1 * G1, 4 * B * P2 * P2), dtype=np.float32)
    for eh in range(2):
        for ew in range(2):
            for b in range(B):
                for ph in range(P2):
                    for pw in range(P2):
                        col = b * G1 * G1 + (2 * ph + eh) * G1 + (2 * pw + ew)
                        out = ((eh * 2 + ew) * B + b) * P2 * P2 + ph * P2 + pw
                        S[col, out] = 1.0
    return jnp.asarray(S)


# ---------------------------------------------------------------------------
# Forward pass (single pallas_call)
# ---------------------------------------------------------------------------
@functools.partial(jax.jit, static_argnames=("kernel_size", "n_classes"))
def simple_cnn_forward(x_nchw, params, *, kernel_size, n_classes):
    x = x_nchw.astype(jnp.float32)
    B, Cin, H, W = x.shape
    K = kernel_size
    C2 = params["w_c1"].shape[3]
    C4 = params["w_c2"].shape[3]
    OH1 = H - K + 1
    G1 = OH1 // 2                 # pooled1 grid (12 for 28x28, K=5)
    OH2 = G1 - K + 1              # conv2 valid output (8)
    P2 = OH2 // 2                 # pooled2 grid (4)
    D = C4 * P2 * P2              # fc1 input features (256)
    H1 = params["w1"].shape[1]    # 120
    H2 = params["w2"].shape[1]    # 84
    assert H1 <= FPAD and H2 <= FPAD and n_classes <= FPAD and D == params["w1"].shape[0]

    eps = 1e-5
    # conv weights -> (Cout, K*K*Cin) with row order (kh, kw, ci); per-channel
    # BN running stats folded to an affine (scale, shift), applied after ReLU.
    w1t = jnp.transpose(params["w_c1"], (3, 0, 1, 2)).reshape(C2, K * K * Cin)
    w2t = jnp.transpose(params["w_c2"], (3, 0, 1, 2)).reshape(C4, K * K * C2)
    b1 = params["b_c1"].reshape(C2, 1)
    b2 = params["b_c2"].reshape(C4, 1)
    s1 = (params["bn1_gamma"] / jnp.sqrt(params["bn1_var"] + eps)).reshape(C2, 1)
    t1 = (params["bn1_beta"] - params["bn1_mean"] *
          params["bn1_gamma"] / jnp.sqrt(params["bn1_var"] + eps)).reshape(C2, 1)
    s2 = (params["bn2_gamma"] / jnp.sqrt(params["bn2_var"] + eps)).reshape(C4, 1)
    t2 = (params["bn2_beta"] - params["bn2_mean"] *
          params["bn2_gamma"] / jnp.sqrt(params["bn2_var"] + eps)).reshape(C4, 1)

    # MLP weights/biases zero-padded to 128 lanes; padded logit lanes get -1e30
    # bias so the 128-wide softmax equals the n_classes-wide one.
    def _pad2(w):
        return jnp.zeros((FPAD, FPAD), jnp.float32).at[:w.shape[0], :w.shape[1]].set(w)
    w_fc1 = jnp.zeros((D, FPAD), jnp.float32).at[:, :H1].set(params["w1"])
    b_fc1 = jnp.zeros((1, FPAD), jnp.float32).at[0, :H1].set(params["b1"])
    w_fc2 = _pad2(params["w2"])
    b_fc2 = jnp.zeros((1, FPAD), jnp.float32).at[0, :H2].set(params["b2"])
    w_fc3 = _pad2(params["w3"])
    b_fc3 = jnp.full((1, FPAD), -1e30, jnp.float32).at[0, :n_classes].set(params["b3"])

    # input-side layout plumbing (tiny, one-shot)
    p1t = _conv1_patches(x, K)                      # (K*K*Cin, 4*B*G1*G1)
    psel = _pool2_selector(B, G1, OH2)              # (B*G1*G1, 4*B*P2*P2)

    inputs = (p1t, w1t, b1, s1, t1, w2t, b2, s2, t2, psel,
              w_fc1, b_fc1, w_fc2, b_fc2, w_fc3, b_fc3)

    def _full_spec(a):
        nd = a.ndim
        return pl.BlockSpec(a.shape, lambda i, _nd=nd: (0,) * _nd)

    kern = functools.partial(_fused_cnn_kernel, B=B, K=K, C2=C2, C4=C4,
                             G1=G1, OH2=OH2)
    probs_padded = pl.pallas_call(
        kern,
        out_shape=jax.ShapeDtypeStruct((B, FPAD), jnp.float32),
        grid_spec=pltpu.PrefetchScalarGridSpec(
            num_scalar_prefetch=0,
            grid=(1,),
            in_specs=[_full_spec(a) for a in inputs],
            out_specs=pl.BlockSpec((B, FPAD), lambda i: (0, 0)),
        ),
        compiler_params=pltpu.CompilerParams(dimension_semantics=("arbitrary",)),
    )(*inputs)
    return probs_padded[:, :n_classes]


# ---------------------------------------------------------------------------
# Pure-JAX reference (for the self-test)
# ---------------------------------------------------------------------------
def reference_forward(x, params, *, kernel_size, n_classes):
    eps = 1e-5

    def conv(inp, w_hwio, b):
        w_oihw = jnp.transpose(w_hwio, (3, 2, 0, 1))
        out = jax.lax.conv_general_dilated(
            inp, w_oihw, window_strides=(1, 1), padding="VALID",
            dimension_numbers=("NCHW", "OIHW", "NCHW"))
        return out + b.reshape(1, -1, 1, 1)

    def bn(inp, g, be, mu, var):
        inv = g / jnp.sqrt(var + eps)
        return (inp - mu.reshape(1, -1, 1, 1)) * inv.reshape(1, -1, 1, 1) \
            + be.reshape(1, -1, 1, 1)

    def pool(inp):
        return jax.lax.reduce_window(inp, -jnp.inf, jax.lax.max,
                                     (1, 1, 2, 2), (1, 1, 2, 2), "VALID")

    y = jnp.maximum(conv(x, params["w_c1"], params["b_c1"]), 0.0)
    y = pool(bn(y, params["bn1_gamma"], params["bn1_beta"],
                params["bn1_mean"], params["bn1_var"]))
    y = jnp.maximum(conv(y, params["w_c2"], params["b_c2"]), 0.0)
    y = pool(bn(y, params["bn2_gamma"], params["bn2_beta"],
                params["bn2_mean"], params["bn2_var"]))
    y = y.reshape(y.shape[0], -1)
    y = jnp.maximum(y @ params["w1"] + params["b1"], 0.0)
    y = jnp.maximum(y @ params["w2"] + params["b2"], 0.0)
    logits = y @ params["w3"] + params["b3"]
    return jax.nn.softmax(logits, axis=1)


# ---------------------------------------------------------------------------
# Deterministic parameter initialization (shapes from the module __init__)
# ---------------------------------------------------------------------------
def init_params(key, channels, n_classes, kernel_size, d_dense):
    c2, c4 = channels * 2, channels * 4
    ks = jax.random.split(key, 5)

    def w(k_, shape, fan_in):
        return jax.random.normal(k_, shape, jnp.float32) / jnp.sqrt(float(fan_in))

    return {
        "w_c1": w(ks[0], (kernel_size, kernel_size, channels, c2),
                  kernel_size * kernel_size * channels),
        "b_c1": jnp.full((c2,), 0.01, jnp.float32),
        "w_c2": w(ks[1], (kernel_size, kernel_size, c2, c4),
                  kernel_size * kernel_size * c2),
        "b_c2": jnp.full((c4,), 0.01, jnp.float32),
        "w1": w(ks[2], (d_dense, 120), d_dense),
        "b1": jnp.zeros((120,), jnp.float32),
        "w2": w(ks[3], (120, 84), 120),
        "b2": jnp.zeros((84,), jnp.float32),
        "w3": w(ks[4], (84, n_classes), 84),
        "b3": jnp.zeros((n_classes,), jnp.float32),
        # BatchNorm2d default running statistics (inference mode)
        "bn1_gamma": jnp.ones((c2,), jnp.float32),
        "bn1_beta": jnp.zeros((c2,), jnp.float32),
        "bn1_mean": jnp.zeros((c2,), jnp.float32),
        "bn1_var": jnp.ones((c2,), jnp.float32),
        "bn2_gamma": jnp.ones((c4,), jnp.float32),
        "bn2_beta": jnp.zeros((c4,), jnp.float32),
        "bn2_mean": jnp.zeros((c4,), jnp.float32),
        "bn2_var": jnp.ones((c4,), jnp.float32),
    }


if __name__ == "__main__":
    B, C, H, W, K = 2, 4, 28, 28, 5
    N_CLASSES = 100  # TODO(synk): stand-in for len(open('/usr/share/dict/words'))
    D = dense_arg(C, H, W, K)  # 256

    key = jax.random.PRNGKey(0)
    kx, kp = jax.random.split(key)
    x = jax.random.normal(kx, (B, C, H, W), jnp.float32)
    params = init_params(kp, channels=C, n_classes=N_CLASSES,
                         kernel_size=K, d_dense=D)

    out = simple_cnn_forward(x, params, kernel_size=K, n_classes=N_CLASSES)
    out = jax.block_until_ready(out)
    ref = reference_forward(x, params, kernel_size=K, n_classes=N_CLASSES)

    assert out.shape == (B, N_CLASSES)
    assert bool(jnp.all(jnp.isfinite(out)))
    # approx reciprocal in the softmax -> rows sum to 1 only to ~1e-3
    assert bool(jnp.allclose(jnp.sum(out, axis=1), 1.0, atol=1e-2))
    assert bool(jnp.allclose(out, ref, atol=2e-3, rtol=2e-3))
    print("KERNEL_OK")
</pallas_src>

<mosaic_0001>
module attributes {stable_mosaic.version = 11 : i64} {
  func.func @_fused_cnn_kernel(%arg0: i32, %arg1: memref<100x1152xf32, #tpu.memory_space<vmem>>, %arg2: memref<8x100xf32, #tpu.memory_space<vmem>>, %arg3: memref<8x1xf32, #tpu.memory_space<vmem>>, %arg4: memref<8x1xf32, #tpu.memory_space<vmem>>, %arg5: memref<8x1xf32, #tpu.memory_space<vmem>>, %arg6: memref<16x200xf32, #tpu.memory_space<vmem>>, %arg7: memref<16x1xf32, #tpu.memory_space<vmem>>, %arg8: memref<16x1xf32, #tpu.memory_space<vmem>>, %arg9: memref<16x1xf32, #tpu.memory_space<vmem>>, %arg10: memref<288x128xf32, #tpu.memory_space<vmem>>, %arg11: memref<256x128xf32, #tpu.memory_space<vmem>>, %arg12: memref<1x128xf32, #tpu.memory_space<vmem>>, %arg13: memref<128x128xf32, #tpu.memory_space<vmem>>, %arg14: memref<1x128xf32, #tpu.memory_space<vmem>>, %arg15: memref<128x128xf32, #tpu.memory_space<vmem>>, %arg16: memref<1x128xf32, #tpu.memory_space<vmem>>, %arg17: memref<2x128xf32, #tpu.memory_space<vmem>>) attributes {dimension_semantics = [#tpu.dimension_semantics<arbitrary>], iteration_bounds = array<i64: 1>, scalar_prefetch = 0 : i64, scratch_operands = 0 : i64, tpu.core_type = #tpu.core_type<tc>, window_params = [{pipeline_mode = #tpu.pipeline_mode<synchronous>, transform_indices = @transform_0, window_bounds = array<i64: 100, 1152>}, {pipeline_mode = #tpu.pipeline_mode<synchronous>, transform_indices = @transform_1, window_bounds = array<i64: 8, 100>}, {pipeline_mode = #tpu.pipeline_mode<synchronous>, transform_indices = @transform_2, window_bounds = array<i64: 8, 1>}, {pipeline_mode = #tpu.pipeline_mode<synchronous>, transform_indices = @transform_3, window_bounds = array<i64: 8, 1>}, {pipeline_mode = #tpu.pipeline_mode<synchronous>, transform_indices = @transform_4, window_bounds = array<i64: 8, 1>}, {pipeline_mode = #tpu.pipeline_mode<synchronous>, transform_indices = @transform_5, window_bounds = array<i64: 16, 200>}, {pipeline_mode = #tpu.pipeline_mode<synchronous>, transform_indices = @transform_6, window_bounds = array<i64: 16, 1>}, {pipeline_mode = #tpu.pipeline_mode<synchronous>, transform_indices = @transform_7, window_bounds = array<i64: 16, 1>}, {pipeline_mode = #tpu.pipeline_mode<synchronous>, transform_indices = @transform_8, window_bounds = array<i64: 16, 1>}, {pipeline_mode = #tpu.pipeline_mode<synchronous>, transform_indices = @transform_9, window_bounds = array<i64: 288, 128>}, {pipeline_mode = #tpu.pipeline_mode<synchronous>, transform_indices = @transform_10, window_bounds = array<i64: 256, 128>}, {pipeline_mode = #tpu.pipeline_mode<synchronous>, transform_indices = @transform_11, window_bounds = array<i64: 1, 128>}, {pipeline_mode = #tpu.pipeline_mode<synchronous>, transform_indices = @transform_12, window_bounds = array<i64: 128, 128>}, {pipeline_mode = #tpu.pipeline_mode<synchronous>, transform_indices = @transform_13, window_bounds = array<i64: 1, 128>}, {pipeline_mode = #tpu.pipeline_mode<synchronous>, transform_indices = @transform_14, window_bounds = array<i64: 128, 128>}, {pipeline_mode = #tpu.pipeline_mode<synchronous>, transform_indices = @transform_15, window_bounds = array<i64: 1, 128>}, {pipeline_mode = #tpu.pipeline_mode<synchronous>, transform_indices = @transform_16, window_bounds = array<i64: 2, 128>}]} {
    %c0 = arith.constant 0 : index
    %c0_0 = arith.constant 0 : index
    %0 = vector.load %arg2[%c0, %c0_0] : memref<8x100xf32, #tpu.memory_space<vmem>>, vector<8x100xf32>
    %c0_1 = arith.constant 0 : index
    %c0_2 = arith.constant 0 : index
    %1 = vector.load %arg1[%c0_1, %c0_2] : memref<100x1152xf32, #tpu.memory_space<vmem>>, vector<100x1152xf32>
    %cst = arith.constant dense<0.000000e+00> : vector<8x1152xf32>
    %2 = tpu.matmul %0, %1, %cst {dimension_numbers = #tpu.dot_dimension_numbers<[1], [0], [0], [1], [0, 0, 1, 1], [], []>} : vector<8x100xf32>, vector<100x1152xf32>, vector<8x1152xf32> -> vector<8x1152xf32>
    %c0_3 = arith.constant 0 : index
    %c0_4 = arith.constant 0 : index
    %3 = vector.load %arg3[%c0_3, %c0_4] : memref<8x1xf32, #tpu.memory_space<vmem>>, vector<8x1xf32>
    %4 = vector.broadcast %3 : vector<8x1xf32> to vector<8x1152xf32>
    %5 = arith.addf %2, %4 : vector<8x1152xf32>
    %cst_5 = arith.constant 0.000000e+00 : f32
    %6 = vector.broadcast %cst_5 : f32 to vector<8x1152xf32>
    %7 = arith.maximumf %5, %6 : vector<8x1152xf32>
    %c0_6 = arith.constant 0 : index
    %c0_7 = arith.constant 0 : index
    %8 = vector.load %arg4[%c0_6, %c0_7] : memref<8x1xf32, #tpu.memory_space<vmem>>, vector<8x1xf32>
    %9 = vector.broadcast %8 : vector<8x1xf32> to vector<8x1152xf32>
    %10 = arith.mulf %7, %9 : vector<8x1152xf32>
    %c0_8 = arith.constant 0 : index
    %c0_9 = arith.constant 0 : index
    %11 = vector.load %arg5[%c0_8, %c0_9] : memref<8x1xf32, #tpu.memory_space<vmem>>, vector<8x1xf32>
    %12 = vector.broadcast %11 : vector<8x1xf32> to vector<8x1152xf32>
    %13 = arith.addf %10, %12 : vector<8x1152xf32>
    %14 = vector.extract_strided_slice %13 {offsets = [0, 0], sizes = [8, 288], strides = [1, 1]} : vector<8x1152xf32> to vector<8x288xf32>
    %15 = vector.extract_strided_slice %13 {offsets = [0, 288], sizes = [8, 288], strides = [1, 1]} : vector<8x1152xf32> to vector<8x288xf32>
    %16 = arith.maximumf %14, %15 : vector<8x288xf32>
    %17 = vector.extract_strided_slice %13 {offsets = [0, 576], sizes = [8, 288], strides = [1, 1]} : vector<8x1152xf32> to vector<8x288xf32>
    %18 = vector.extract_strided_slice %13 {offsets = [0, 864], sizes = [8, 288], strides = [1, 1]} : vector<8x1152xf32> to vector<8x288xf32>
    %19 = arith.maximumf %17, %18 : vector<8x288xf32>
    %20 = arith.maximumf %16, %19 : vector<8x288xf32>
    %cst_10 = arith.constant 0.000000e+00 : f32
    %21 = vector.broadcast %cst_10 : f32 to vector<8x52xf32>
    %22 = tpu.concatenate %20, %21 in 1 : vector<8x288xf32>, vector<8x52xf32> -> vector<8x340xf32>
    %23 = vector.extract_strided_slice %22 {offsets = [0, 0], sizes = [8, 288], strides = [1, 1]} : vector<8x340xf32> to vector<8x288xf32>
    %24 = vector.extract_strided_slice %22 {offsets = [0, 1], sizes = [8, 288], strides = [1, 1]} : vector<8x340xf32> to vector<8x288xf32>
    %25 = vector.extract_strided_slice %22 {offsets = [0, 2], sizes = [8, 288], strides = [1, 1]} : vector<8x340xf32> to vector<8x288xf32>
    %26 = vector.extract_strided_slice %22 {offsets = [0, 3], sizes = [8, 288], strides = [1, 1]} : vector<8x340xf32> to vector<8x288xf32>
    %27 = vector.extract_strided_slice %22 {offsets = [0, 4], sizes = [8, 288], strides = [1, 1]} : vector<8x340xf32> to vector<8x288xf32>
    %28 = vector.extract_strided_slice %22 {offsets = [0, 12], sizes = [8, 288], strides = [1, 1]} : vector<8x340xf32> to vector<8x288xf32>
    %29 = vector.extract_strided_slice %22 {offsets = [0, 13], sizes = [8, 288], strides = [1, 1]} : vector<8x340xf32> to vector<8x288xf32>
    %30 = vector.extract_strided_slice %22 {offsets = [0, 14], sizes = [8, 288], strides = [1, 1]} : vector<8x340xf32> to vector<8x288xf32>
    %31 = vector.extract_strided_slice %22 {offsets = [0, 15], sizes = [8, 288], strides = [1, 1]} : vector<8x340xf32> to vector<8x288xf32>
    %32 = vector.extract_strided_slice %22 {offsets = [0, 16], sizes = [8, 288], strides = [1, 1]} : vector<8x340xf32> to vector<8x288xf32>
    %33 = vector.extract_strided_slice %22 {offsets = [0, 24], sizes = [8, 288], strides = [1, 1]} : vector<8x340xf32> to vector<8x288xf32>
    %34 = vector.extract_strided_slice %22 {offsets = [0, 25], sizes = [8, 288], strides = [1, 1]} : vector<8x340xf32> to vector<8x288xf32>
    %35 = vector.extract_strided_slice %22 {offsets = [0, 26], sizes = [8, 288], strides = [1, 1]} : vector<8x340xf32> to vector<8x288xf32>
    %36 = vector.extract_strided_slice %22 {offsets = [0, 27], sizes = [8, 288], strides = [1, 1]} : vector<8x340xf32> to vector<8x288xf32>
    %37 = vector.extract_strided_slice %22 {offsets = [0, 28], sizes = [8, 288], strides = [1, 1]} : vector<8x340xf32> to vector<8x288xf32>
    %38 = vector.extract_strided_slice %22 {offsets = [0, 36], sizes = [8, 288], strides = [1, 1]} : vector<8x340xf32> to vector<8x288xf32>
    %39 = vector.extract_strided_slice %22 {offsets = [0, 37], sizes = [8, 288], strides = [1, 1]} : vector<8x340xf32> to vector<8x288xf32>
    %40 = vector.extract_strided_slice %22 {offsets = [0, 38], sizes = [8, 288], strides = [1, 1]} : vector<8x340xf32> to vector<8x288xf32>
    %41 = vector.extract_strided_slice %22 {offsets = [0, 39], sizes = [8, 288], strides = [1, 1]} : vector<8x340xf32> to vector<8x288xf32>
    %42 = vector.extract_strided_slice %22 {offsets = [0, 40], sizes = [8, 288], strides = [1, 1]} : vector<8x340xf32> to vector<8x288xf32>
    %43 = vector.extract_strided_slice %22 {offsets = [0, 48], sizes = [8, 288], strides = [1, 1]} : vector<8x340xf32> to vector<8x288xf32>
    %44 = vector.extract_strided_slice %22 {offsets = [0, 49], sizes = [8, 288], strides = [1, 1]} : vector<8x340xf32> to vector<8x288xf32>
    %45 = vector.extract_strided_slice %22 {offsets = [0, 50], sizes = [8, 288], strides = [1, 1]} : vector<8x340xf32> to vector<8x288xf32>
    %46 = vector.extract_strided_slice %22 {offsets = [0, 51], sizes = [8, 288], strides = [1, 1]} : vector<8x340xf32> to vector<8x288xf32>
    %47 = vector.extract_strided_slice %22 {offsets = [0, 52], sizes = [8, 288], strides = [1, 1]} : vector<8x340xf32> to vector<8x288xf32>
    %48 = tpu.concatenate %23, %24, %25, %26, %27, %28, %29, %30, %31, %32, %33, %34, %35, %36, %37, %38 in 0 : vector<8x288xf32>, vector<8x288xf32>, vector<8x288xf32>, vector<8x288xf32>, vector<8x288xf32>, vector<8x288xf32>, vector<8x288xf32>, vector<8x288xf32>, vector<8x288xf32>, vector<8x288xf32>, vector<8x288xf32>, vector<8x288xf32>, vector<8x288xf32>, vector<8x288xf32>, vector<8x288xf32>, vector<8x288xf32> -> vector<128x288xf32>
    %49 = tpu.concatenate %39, %40, %41, %42, %43, %44, %45, %46, %47 in 0 : vector<8x288xf32>, vector<8x288xf32>, vector<8x288xf32>, vector<8x288xf32>, vector<8x288xf32>, vector<8x288xf32>, vector<8x288xf32>, vector<8x288xf32>, vector<8x288xf32> -> vector<72x288xf32>
    %50 = tpu.concatenate %48, %49 in 0 : vector<128x288xf32>, vector<72x288xf32> -> vector<200x288xf32>
    %c0_11 = arith.constant 0 : index
    %c0_12 = arith.constant 0 : index
    %51 = vector.load %arg6[%c0_11, %c0_12] : memref<16x200xf32, #tpu.memory_space<vmem>>, vector<16x200xf32>
    %cst_13 = arith.constant dense<0.000000e+00> : vector<16x288xf32>
    %52 = tpu.matmul %51, %50, %cst_13 {dimension_numbers = #tpu.dot_dimension_numbers<[1], [0], [0], [1], [0, 0, 1, 1], [], []>} : vector<16x200xf32>, vector<200x288xf32>, vector<16x288xf32> -> vector<16x288xf32>
    %c0_14 = arith.constant 0 : index
    %c0_15 = arith.constant 0 : index
    %53 = vector.load %arg7[%c0_14, %c0_15] : memref<16x1xf32, #tpu.memory_space<vmem>>, vector<16x1xf32>
    %54 = vector.broadcast %53 : vector<16x1xf32> to vector<16x288xf32>
    %55 = arith.addf %52, %54 : vector<16x288xf32>
    %cst_16 = arith.constant 0.000000e+00 : f32
    %56 = vector.broadcast %cst_16 : f32 to vector<16x288xf32>
    %57 = arith.maximumf %55, %56 : vector<16x288xf32>
    %c0_17 = arith.constant 0 : index
    %c0_18 = arith.constant 0 : index
    %58 = vector.load %arg8[%c0_17, %c0_18] : memref<16x1xf32, #tpu.memory_space<vmem>>, vector<16x1xf32>
    %59 = vector.broadcast %58 : vector<16x1xf32> to vector<16x288xf32>
    %60 = arith.mulf %57, %59 : vector<16x288xf32>
    %c0_19 = arith.constant 0 : index
    %c0_20 = arith.constant 0 : index
    %61 = vector.load %arg9[%c0_19, %c0_20] : memref<16x1xf32, #tpu.memory_space<vmem>>, vector<16x1xf32>
    %62 = vector.broadcast %61 : vector<16x1xf32> to vector<16x288xf32>
    %63 = arith.addf %60, %62 : vector<16x288xf32>
    %c0_21 = arith.constant 0 : index
    %c0_22 = arith.constant 0 : index
    %64 = vector.load %arg10[%c0_21, %c0_22] : memref<288x128xf32, #tpu.memory_space<vmem>>, vector<288x128xf32>
    %cst_23 = arith.constant dense<0.000000e+00> : vector<16x128xf32>
    %65 = tpu.matmul %63, %64, %cst_23 {dimension_numbers = #tpu.dot_dimension_numbers<[1], [0], [0], [1], [0, 0, 1, 1], [], []>} : vector<16x288xf32>, vector<288x128xf32>, vector<16x128xf32> -> vector<16x128xf32>
    %66 = vector.extract_strided_slice %65 {offsets = [0, 0], sizes = [16, 32], strides = [1, 1]} : vector<16x128xf32> to vector<16x32xf32>
    %67 = vector.extract_strided_slice %65 {offsets = [0, 32], sizes = [16, 32], strides = [1, 1]} : vector<16x128xf32> to vector<16x32xf32>
    %68 = arith.maximumf %66, %67 : vector<16x32xf32>
    %69 = vector.extract_strided_slice %65 {offsets = [0, 64], sizes = [16, 32], strides = [1, 1]} : vector<16x128xf32> to vector<16x32xf32>
    %70 = vector.extract_strided_slice %65 {offsets = [0, 96], sizes = [16, 32], strides = [1, 1]} : vector<16x128xf32> to vector<16x32xf32>
    %71 = arith.maximumf %69, %70 : vector<16x32xf32>
    %72 = arith.maximumf %68, %71 : vector<16x32xf32>
    %73 = vector.extract_strided_slice %72 {offsets = [0, 0], sizes = [1, 16], strides = [1, 1]} : vector<16x32xf32> to vector<1x16xf32>
    %74 = vector.extract_strided_slice %72 {offsets = [1, 0], sizes = [1, 16], strides = [1, 1]} : vector<16x32xf32> to vector<1x16xf32>
    %75 = vector.extract_strided_slice %72 {offsets = [2, 0], sizes = [1, 16], strides = [1, 1]} : vector<16x32xf32> to vector<1x16xf32>
    %76 = vector.extract_strided_slice %72 {offsets = [3, 0], sizes = [1, 16], strides = [1, 1]} : vector<16x32xf32> to vector<1x16xf32>
    %77 = vector.extract_strided_slice %72 {offsets = [4, 0], sizes = [1, 16], strides = [1, 1]} : vector<16x32xf32> to vector<1x16xf32>
    %78 = vector.extract_strided_slice %72 {offsets = [5, 0], sizes = [1, 16], strides = [1, 1]} : vector<16x32xf32> to vector<1x16xf32>
    %79 = vector.extract_strided_slice %72 {offsets = [6, 0], sizes = [1, 16], strides = [1, 1]} : vector<16x32xf32> to vector<1x16xf32>
    %80 = vector.extract_strided_slice %72 {offsets = [7, 0], sizes = [1, 16], strides = [1, 1]} : vector<16x32xf32> to vector<1x16xf32>
    %81 = vector.extract_strided_slice %72 {offsets = [8, 0], sizes = [1, 16], strides = [1, 1]} : vector<16x32xf32> to vector<1x16xf32>
    %82 = vector.extract_strided_slice %72 {offsets = [9, 0], sizes = [1, 16], strides = [1, 1]} : vector<16x32xf32> to vector<1x16xf32>
    %83 = vector.extract_strided_slice %72 {offsets = [10, 0], sizes = [1, 16], strides = [1, 1]} : vector<16x32xf32> to vector<1x16xf32>
    %84 = vector.extract_strided_slice %72 {offsets = [11, 0], sizes = [1, 16], strides = [1, 1]} : vector<16x32xf32> to vector<1x16xf32>
    %85 = vector.extract_strided_slice %72 {offsets = [12, 0], sizes = [1, 16], strides = [1, 1]} : vector<16x32xf32> to vector<1x16xf32>
    %86 = vector.extract_strided_slice %72 {offsets = [13, 0], sizes = [1, 16], strides = [1, 1]} : vector<16x32xf32> to vector<1x16xf32>
    %87 = vector.extract_strided_slice %72 {offsets = [14, 0], sizes = [1, 16], strides = [1, 1]} : vector<16x32xf32> to vector<1x16xf32>
    %88 = vector.extract_strided_slice %72 {offsets = [15, 0], sizes = [1, 16], strides = [1, 1]} : vector<16x32xf32> to vector<1x16xf32>
    %89 = tpu.concatenate %73, %74, %75, %76, %77, %78, %79, %80, %81, %82, %83, %84, %85, %86, %87, %88 in 1 : vector<1x16xf32>, vector<1x16xf32>, vector<1x16xf32>, vector<1x16xf32>, vector<1x16xf32>, vector<1x16xf32>, vector<1x16xf32>, vector<1x16xf32>, vector<1x16xf32>, vector<1x16xf32>, vector<1x16xf32>, vector<1x16xf32>, vector<1x16xf32>, vector<1x16xf32>, vector<1x16xf32>, vector<1x16xf32> -> vector<1x256xf32>
    %90 = vector.extract_strided_slice %72 {offsets = [0, 16], sizes = [1, 16], strides = [1, 1]} : vector<16x32xf32> to vector<1x16xf32>
    %91 = vector.extract_strided_slice %72 {offsets = [1, 16], sizes = [1, 16], strides = [1, 1]} : vector<16x32xf32> to vector<1x16xf32>
    %92 = vector.extract_strided_slice %72 {offsets = [2, 16], sizes = [1, 16], strides = [1, 1]} : vector<16x32xf32> to vector<1x16xf32>
    %93 = vector.extract_strided_slice %72 {offsets = [3, 16], sizes = [1, 16], strides = [1, 1]} : vector<16x32xf32> to vector<1x16xf32>
    %94 = vector.extract_strided_slice %72 {offsets = [4, 16], sizes = [1, 16], strides = [1, 1]} : vector<16x32xf32> to vector<1x16xf32>
    %95 = vector.extract_strided_slice %72 {offsets = [5, 16], sizes = [1, 16], strides = [1, 1]} : vector<16x32xf32> to vector<1x16xf32>
    %96 = vector.extract_strided_slice %72 {offsets = [6, 16], sizes = [1, 16], strides = [1, 1]} : vector<16x32xf32> to vector<1x16xf32>
    %97 = vector.extract_strided_slice %72 {offsets = [7, 16], sizes = [1, 16], strides = [1, 1]} : vector<16x32xf32> to vector<1x16xf32>
    %98 = vector.extract_strided_slice %72 {offsets = [8, 16], sizes = [1, 16], strides = [1, 1]} : vector<16x32xf32> to vector<1x16xf32>
    %99 = vector.extract_strided_slice %72 {offsets = [9, 16], sizes = [1, 16], strides = [1, 1]} : vector<16x32xf32> to vector<1x16xf32>
    %100 = vector.extract_strided_slice %72 {offsets = [10, 16], sizes = [1, 16], strides = [1, 1]} : vector<16x32xf32> to vector<1x16xf32>
    %101 = vector.extract_strided_slice %72 {offsets = [11, 16], sizes = [1, 16], strides = [1, 1]} : vector<16x32xf32> to vector<1x16xf32>
    %102 = vector.extract_strided_slice %72 {offsets = [12, 16], sizes = [1, 16], strides = [1, 1]} : vector<16x32xf32> to vector<1x16xf32>
    %103 = vector.extract_strided_slice %72 {offsets = [13, 16], sizes = [1, 16], strides = [1, 1]} : vector<16x32xf32> to vector<1x16xf32>
    %104 = vector.extract_strided_slice %72 {offsets = [14, 16], sizes = [1, 16], strides = [1, 1]} : vector<16x32xf32> to vector<1x16xf32>
    %105 = vector.extract_strided_slice %72 {offsets = [15, 16], sizes = [1, 16], strides = [1, 1]} : vector<16x32xf32> to vector<1x16xf32>
    %106 = tpu.concatenate %90, %91, %92, %93, %94, %95, %96, %97, %98, %99, %100, %101, %102, %103, %104, %105 in 1 : vector<1x16xf32>, vector<1x16xf32>, vector<1x16xf32>, vector<1x16xf32>, vector<1x16xf32>, vector<1x16xf32>, vector<1x16xf32>, vector<1x16xf32>, vector<1x16xf32>, vector<1x16xf32>, vector<1x16xf32>, vector<1x16xf32>, vector<1x16xf32>, vector<1x16xf32>, vector<1x16xf32>, vector<1x16xf32> -> vector<1x256xf32>
    %107 = tpu.concatenate %89, %106 in 0 : vector<1x256xf32>, vector<1x256xf32> -> vector<2x256xf32>
    %c0_24 = arith.constant 0 : index
    %c0_25 = arith.constant 0 : index
    %108 = vector.load %arg11[%c0_24, %c0_25] : memref<256x128xf32, #tpu.memory_space<vmem>>, vector<256x128xf32>
    %cst_26 = arith.constant dense<0.000000e+00> : vector<2x128xf32>
    %109 = tpu.matmul %107, %108, %cst_26 {dimension_numbers = #tpu.dot_dimension_numbers<[1], [0], [0], [1], [0, 0, 1, 1], [], []>} : vector<2x256xf32>, vector<256x128xf32>, vector<2x128xf32> -> vector<2x128xf32>
    %c0_27 = arith.constant 0 : index
    %c0_28 = arith.constant 0 : index
    %110 = vector.load %arg12[%c0_27, %c0_28] : memref<1x128xf32, #tpu.memory_space<vmem>>, vector<1x128xf32>
    %111 = vector.broadcast %110 : vector<1x128xf32> to vector<2x128xf32>
    %112 = arith.addf %109, %111 : vector<2x128xf32>
    %cst_29 = arith.constant 0.000000e+00 : f32
    %113 = vector.broadcast %cst_29 : f32 to vector<2x128xf32>
    %114 = arith.maximumf %112, %113 : vector<2x128xf32>
    %c0_30 = arith.constant 0 : index
    %c0_31 = arith.constant 0 : index
    %115 = vector.load %arg13[%c0_30, %c0_31] : memref<128x128xf32, #tpu.memory_space<vmem>>, vector<128x128xf32>
    %cst_32 = arith.constant dense<0.000000e+00> : vector<2x128xf32>
    %116 = tpu.matmul %114, %115, %cst_32 {dimension_numbers = #tpu.dot_dimension_numbers<[1], [0], [0], [1], [0, 0, 1, 1], [], []>} : vector<2x128xf32>, vector<128x128xf32>, vector<2x128xf32> -> vector<2x128xf32>
    %c0_33 = arith.constant 0 : index
    %c0_34 = arith.constant 0 : index
    %117 = vector.load %arg14[%c0_33, %c0_34] : memref<1x128xf32, #tpu.memory_space<vmem>>, vector<1x128xf32>
    %118 = vector.broadcast %117 : vector<1x128xf32> to vector<2x128xf32>
    %119 = arith.addf %116, %118 : vector<2x128xf32>
    %cst_35 = arith.constant 0.000000e+00 : f32
    %120 = vector.broadcast %cst_35 : f32 to vector<2x128xf32>
    %121 = arith.maximumf %119, %120 : vector<2x128xf32>
    %c0_36 = arith.constant 0 : index
    %c0_37 = arith.constant 0 : index
    %122 = vector.load %arg15[%c0_36, %c0_37] : memref<128x128xf32, #tpu.memory_space<vmem>>, vector<128x128xf32>
    %cst_38 = arith.constant dense<0.000000e+00> : vector<2x128xf32>
    %123 = tpu.matmul %121, %122, %cst_38 {dimension_numbers = #tpu.dot_dimension_numbers<[1], [0], [0], [1], [0, 0, 1, 1], [], []>} : vector<2x128xf32>, vector<128x128xf32>, vector<2x128xf32> -> vector<2x128xf32>
    %c0_39 = arith.constant 0 : index
    %c0_40 = arith.constant 0 : index
    %124 = vector.load %arg16[%c0_39, %c0_40] : memref<1x128xf32, #tpu.memory_space<vmem>>, vector<1x128xf32>
    %125 = vector.broadcast %124 : vector<1x128xf32> to vector<2x128xf32>
    %126 = arith.addf %123, %125 : vector<2x128xf32>
    %cst_41 = arith.constant dense<0xFF800000> : vector<2xf32>
    %127 = vector.multi_reduction <maximumf>, %126, %cst_41 [1] : vector<2x128xf32> to vector<2xf32>
    %128 = vector.shape_cast %127 : vector<2xf32> to vector<2x1xf32>
    %129 = vector.broadcast %128 : vector<2x1xf32> to vector<2x128xf32>
    %130 = arith.subf %126, %129 : vector<2x128xf32>
    %131 = math.exp %130 : vector<2x128xf32>
    %cst_42 = arith.constant dense<0.000000e+00> : vector<2xf32>
    %132 = vector.multi_reduction <add>, %131, %cst_42 [1] : vector<2x128xf32> to vector<2xf32>
    %133 = vector.shape_cast %132 : vector<2xf32> to vector<2x1xf32>
    %134 = tpu.reciprocal %133 {approx = true} : vector<2x1xf32> -> vector<2x1xf32>
    %135 = vector.broadcast %134 : vector<2x1xf32> to vector<2x128xf32>
    %136 = arith.mulf %131, %135 : vector<2x128xf32>
    %c0_43 = arith.constant 0 : index
    %c0_44 = arith.constant 0 : index
    %137 = vector.load %arg17[%c0_43, %c0_44] : memref<2x128xf32, #tpu.memory_space<vmem>>, vector<2x128xf32>
    tpu.vector_store %arg17[%c0_43, %c0_44], %136 {strides = array<i32>} : memref<2x128xf32, #tpu.memory_space<vmem>>, vector<2x128xf32>,
    return
  }
  func.func @transform_0(%arg0: i32) -> (i32, i32) {
    %c0_i32 = arith.constant 0 : i32
    %c0_i32_0 = arith.constant 0 : i32
    %c0_i32_1 = arith.constant 0 : i32
    return %c0_i32, %c0_i32_0 : i32, i32
  }
  func.func @transform_1(%arg0: i32) -> (i32, i32) {
    %c0_i32 = arith.constant 0 : i32
    %c0_i32_0 = arith.constant 0 : i32
    %c0_i32_1 = arith.constant 0 : i32
    return %c0_i32, %c0_i32_0 : i32, i32
  }
  func.func @transform_2(%arg0: i32) -> (i32, i32) {
    %c0_i32 = arith.constant 0 : i32
    %c0_i32_0 = arith.constant 0 : i32
    %c0_i32_1 = arith.constant 0 : i32
    return %c0_i32, %c0_i32_0 : i32, i32
  }
  func.func @transform_3(%arg0: i32) -> (i32, i32) {
    %c0_i32 = arith.constant 0 : i32
    %c0_i32_0 = arith.constant 0 : i32
    %c0_i32_1 = arith.constant 0 : i32
    return %c0_i32, %c0_i32_0 : i32, i32
  }
  func.func @transform_4(%arg0: i32) -> (i32, i32) {
    %c0_i32 = arith.constant 0 : i32
    %c0_i32_0 = arith.constant 0 : i32
    %c0_i32_1 = arith.constant 0 : i32
    return %c0_i32, %c0_i32_0 : i32, i32
  }
  func.func @transform_5(%arg0: i32) -> (i32, i32) {
    %c0_i32 = arith.constant 0 : i32
    %c0_i32_0 = arith.constant 0 : i32
    %c0_i32_1 = arith.constant 0 : i32
    return %c0_i32, %c0_i32_0 : i32, i32
  }
  func.func @transform_6(%arg0: i32) -> (i32, i32) {
    %c0_i32 = arith.constant 0 : i32
    %c0_i32_0 = arith.constant 0 : i32
    %c0_i32_1 = arith.constant 0 : i32
    return %c0_i32, %c0_i32_0 : i32, i32
  }
  func.func @transform_7(%arg0: i32) -> (i32, i32) {
    %c0_i32 = arith.constant 0 : i32
    %c0_i32_0 = arith.constant 0 : i32
    %c0_i32_1 = arith.constant 0 : i32
    return %c0_i32, %c0_i32_0 : i32, i32
  }
  func.func @transform_8(%arg0: i32) -> (i32, i32) {
    %c0_i32 = arith.constant 0 : i32
    %c0_i32_0 = arith.constant 0 : i32
    %c0_i32_1 = arith.constant 0 : i32
    return %c0_i32, %c0_i32_0 : i32, i32
  }
  func.func @transform_9(%arg0: i32) -> (i32, i32) {
    %c0_i32 = arith.constant 0 : i32
    %c0_i32_0 = arith.constant 0 : i32
    %c0_i32_1 = arith.constant 0 : i32
    return %c0_i32, %c0_i32_0 : i32, i32
  }
  func.func @transform_10(%arg0: i32) -> (i32, i32) {
    %c0_i32 = arith.constant 0 : i32
    %c0_i32_0 = arith.constant 0 : i32
    %c0_i32_1 = arith.constant 0 : i32
    return %c0_i32, %c0_i32_0 : i32, i32
  }
  func.func @transform_11(%arg0: i32) -> (i32, i32) {
    %c0_i32 = arith.constant 0 : i32
    %c0_i32_0 = arith.constant 0 : i32
    %c0_i32_1 = arith.constant 0 : i32
    return %c0_i32, %c0_i32_0 : i32, i32
  }
  func.func @transform_12(%arg0: i32) -> (i32, i32) {
    %c0_i32 = arith.constant 0 : i32
    %c0_i32_0 = arith.constant 0 : i32
    %c0_i32_1 = arith.constant 0 : i32
    return %c0_i32, %c0_i32_0 : i32, i32
  }
  func.func @transform_13(%arg0: i32) -> (i32, i32) {
    %c0_i32 = arith.constant 0 : i32
    %c0_i32_0 = arith.constant 0 : i32
    %c0_i32_1 = arith.constant 0 : i32
    return %c0_i32, %c0_i32_0 : i32, i32
  }
  func.func @transform_14(%arg0: i32) -> (i32, i32) {
    %c0_i32 = arith.constant 0 : i32
    %c0_i32_0 = arith.constant 0 : i32
    %c0_i32_1 = arith.constant 0 : i32
    return %c0_i32, %c0_i32_0 : i32, i32
  }
  func.func @transform_15(%arg0: i32) -> (i32, i32) {
    %c0_i32 = arith.constant 0 : i32
    %c0_i32_0 = arith.constant 0 : i32
    %c0_i32_1 = arith.constant 0 : i32
    return %c0_i32, %c0_i32_0 : i32, i32
  }
  func.func @transform_16(%arg0: i32) -> (i32, i32) {
    %c0_i32 = arith.constant 0 : i32
    %c0_i32_0 = arith.constant 0 : i32
    %c0_i32_1 = arith.constant 0 : i32
    return %c0_i32, %c0_i32_0 : i32, i32
  }
}

</mosaic_0001>

<llo_original>
// kernel: simple_cnn_forward.1
$region0: #{simple_cnn_forward.1}
  #allocation0 [shape = 'u32[]', space=smem, size = 0x4, offset = 0x4, fixed_abs, tag = 'smem constant byte address 0x4 - core index']
  #allocation1 [shape = 'u32[144,128]{1,0:T(1,128)}', space=vmem, size = 0x12000, scoped, tag = 'internal scratch']
  %s0 = inlined_call_operand.vmem [shape: f32[100,1152], index: 0, kind: input, shape index: {}]
  %s1 = inlined_call_operand.vmem [shape: f32[8,100], index: 1, kind: input, shape index: {}]
  %s2 = inlined_call_operand.vmem [shape: f32[8,1], index: 2, kind: input, shape index: {}]
  %s3 = inlined_call_operand.vmem [shape: f32[8,1], index: 3, kind: input, shape index: {}]
  %s4 = inlined_call_operand.vmem [shape: f32[8,1], index: 4, kind: input, shape index: {}]
  %s5 = inlined_call_operand.vmem [shape: f32[16,200], index: 5, kind: input, shape index: {}]
  %s6 = inlined_call_operand.vmem [shape: f32[16,1], index: 6, kind: input, shape index: {}]
  %s7 = inlined_call_operand.vmem [shape: f32[16,1], index: 7, kind: input, shape index: {}]
  %s8 = inlined_call_operand.vmem [shape: f32[16,1], index: 8, kind: input, shape index: {}]
  %s9 = inlined_call_operand.vmem [shape: f32[288,128], index: 9, kind: input, shape index: {}]
  %s10 = inlined_call_operand.vmem [shape: f32[256,128], index: 10, kind: input, shape index: {}]
  %s11 = inlined_call_operand.vmem [shape: f32[1,128], index: 11, kind: input, shape index: {}]
  %s12 = inlined_call_operand.vmem [shape: f32[128,128], index: 12, kind: input, shape index: {}]
  %s13 = inlined_call_operand.vmem [shape: f32[1,128], index: 13, kind: input, shape index: {}]
  %s14 = inlined_call_operand.vmem [shape: f32[128,128], index: 14, kind: input, shape index: {}]
  %s15 = inlined_call_operand.vmem [shape: f32[1,128], index: 15, kind: input, shape index: {}]
  %s16 = inlined_call_operand.hbm [shape: f32[2,128], index: 16, kind: output, shape index: {}]
  %s17 = sld [smem:[#allocation0]]
  $region74: #{simple_cnn_forward.1} parent=0
    _
  %s19 = ssub.s32 1, %s17
  %s20 = scalar_select 0, %s19, %s17
  $region1: #{simple_cnn_forward.1} parent=0
    #allocation2 [shape = 'u8[1024]{0}', space=vmem, size = 0x400, scoped, tag = 'output window, operand 0, single buffered']
    #allocation3 [shape = 's32[1]{0}', space=sflag, size = 0x4, scoped, tag = 'scoped memory for simple_cnn_forward.1']
    %21 = vsyncpa [#allocation3], 0
    // Predicated region
    $region2: #{simple_cnn_forward.1} parent=1 // pred_check
      _
    $region3: #{simple_cnn_forward.1} parent=1 // pred_check_branch
      %23 = sbr.rel (0) target = $region5
    $region4: #{simple_cnn_forward.1} parent=1 // pred_region
      _
    $region5: #{simple_cnn_forward.1} parent=1 // pred_fallthru
      _
    // Predicated region
    $region6: #{simple_cnn_forward.1} parent=1 // pred_check
      _
    $region7: #{simple_cnn_forward.1} parent=1 // pred_check_branch
      %25 = sbr.rel (0) target = $region9
    $region8: #{simple_cnn_forward.1} parent=1 // pred_region
      _
    $region9: #{simple_cnn_forward.1} parent=1 // pred_fallthru
      _
    // Predicated region
    $region10: #{simple_cnn_forward.1} parent=1 // pred_check
      _
    $region11: #{simple_cnn_forward.1} parent=1 // pred_check_branch
      %27 = sbr.rel (0) target = $region13
    $region12: #{simple_cnn_forward.1} parent=1 // pred_region
      _
    $region13: #{simple_cnn_forward.1} parent=1 // pred_fallthru
      _
    // Predicated region
    $region14: #{simple_cnn_forward.1} parent=1 // pred_check
      _
    $region15: #{simple_cnn_forward.1} parent=1 // pred_check_branch
      %29 = sbr.rel (0) target = $region17
    $region16: #{simple_cnn_forward.1} parent=1 // pred_region
      _
    $region17: #{simple_cnn_forward.1} parent=1 // pred_fallthru
      _
    // Predicated region
    $region18: #{simple_cnn_forward.1} parent=1 // pred_check
      _
    $region19: #{simple_cnn_forward.1} parent=1 // pred_check_branch
      %31 = sbr.rel (0) target = $region21
    $region20: #{simple_cnn_forward.1} parent=1 // pred_region
      _
    $region21: #{simple_cnn_forward.1} parent=1 // pred_fallthru
      _
    // Predicated region
    $region22: #{simple_cnn_forward.1} parent=1 // pred_check
      _
    $region23: #{simple_cnn_forward.1} parent=1 // pred_check_branch
      %33 = sbr.rel (0) target = $region25
    $region24: #{simple_cnn_forward.1} parent=1 // pred_region
      _
    $region25: #{simple_cnn_forward.1} parent=1 // pred_fallthru
      _
    // Predicated region
    $region26: #{simple_cnn_forward.1} parent=1 // pred_check
      _
    $region27: #{simple_cnn_forward.1} parent=1 // pred_check_branch
      %35 = sbr.rel (0) target = $region29
    $region28: #{simple_cnn_forward.1} parent=1 // pred_region
      _
    $region29: #{simple_cnn_forward.1} parent=1 // pred_fallthru
      _
    // Predicated region
    $region30: #{simple_cnn_forward.1} parent=1 // pred_check
      _
    $region31: #{simple_cnn_forward.1} parent=1 // pred_check_branch
      %37 = sbr.rel (0) target = $region33
    $region32: #{simple_cnn_forward.1} parent=1 // pred_region
      _
    $region33: #{simple_cnn_forward.1} parent=1 // pred_fallthru
      _
    // Predicated region
    $region34: #{simple_cnn_forward.1} parent=1 // pred_check
      _
    $region35: #{simple_cnn_forward.1} parent=1 // pred_check_branch
      %39 = sbr.rel (0) target = $region37
    $region36: #{simple_cnn_forward.1} parent=1 // pred_region
      _
    $region37: #{simple_cnn_forward.1} parent=1 // pred_fallthru
      _
    // Predicated region
    $region38: #{simple_cnn_forward.1} parent=1 // pred_check
      _
    $region39: #{simple_cnn_forward.1} parent=1 // pred_check_branch
      %41 = sbr.rel (0) target = $region41
    $region40: #{simple_cnn_forward.1} parent=1 // pred_region
      _
    $region41: #{simple_cnn_forward.1} parent=1 // pred_fallthru
      _
    // Predicated region
    $region42: #{simple_cnn_forward.1} parent=1 // pred_check
      _
    $region43: #{simple_cnn_forward.1} parent=1 // pred_check_branch
      %43 = sbr.rel (0) target = $region45
    $region44: #{simple_cnn_forward.1} parent=1 // pred_region
      _
    $region45: #{simple_cnn_forward.1} parent=1 // pred_fallthru
      _
    // Predicated region
    $region46: #{simple_cnn_forward.1} parent=1 // pred_check
      _
    $region47: #{simple_cnn_forward.1} parent=1 // pred_check_branch
      %45 = sbr.rel (0) target = $region49
    $region48: #{simple_cnn_forward.1} parent=1 // pred_region
      _
    $region49: #{simple_cnn_forward.1} parent=1 // pred_fallthru
      _
    // Predicated region
    $region50: #{simple_cnn_forward.1} parent=1 // pred_check
      _
    $region51: #{simple_cnn_forward.1} parent=1 // pred_check_branch
      %47 = sbr.rel (0) target = $region53
    $region52: #{simple_cnn_forward.1} parent=1 // pred_region
      _
    $region53: #{simple_cnn_forward.1} parent=1 // pred_fallthru
      _
    // Predicated region
    $region54: #{simple_cnn_forward.1} parent=1 // pred_check
      _
    $region55: #{simple_cnn_forward.1} parent=1 // pred_check_branch
      %49 = sbr.rel (0) target = $region57
    $region56: #{simple_cnn_forward.1} parent=1 // pred_region
      _
    $region57: #{simple_cnn_forward.1} parent=1 // pred_fallthru
      _
    // Predicated region
    $region58: #{simple_cnn_forward.1} parent=1 // pred_check
      _
    $region59: #{simple_cnn_forward.1} parent=1 // pred_check_branch
      %51 = sbr.rel (0) target = $region61
    $region60: #{simple_cnn_forward.1} parent=1 // pred_region
      _
    $region61: #{simple_cnn_forward.1} parent=1 // pred_fallthru
      _
    // Predicated region
    $region62: #{simple_cnn_forward.1} parent=1 // pred_check
      _
    $region63: #{simple_cnn_forward.1} parent=1 // pred_check_branch
      %53 = sbr.rel (0) target = $region65
    $region64: #{simple_cnn_forward.1} parent=1 // pred_region
      _
    $region65: #{simple_cnn_forward.1} parent=1 // pred_fallthru
      _
    %v54 = vld [vmem:[%s1] sm:$0xff]
    %v55 = vld [vmem:[%s0] sm:$0xff]
    %v56 = vld [vmem:[%s0 + $0x8] sm:$0xff]
    %v57 = vld [vmem:[%s0 + $0x10] sm:$0xff]
    %v58 = vld [vmem:[%s0 + $0x18] sm:$0xff]
    %v59 = vld [vmem:[%s0 + $0x20] sm:$0xff]
    %v60 = vld [vmem:[%s0 + $0x28] sm:$0xff]
    %v61 = vld [vmem:[%s0 + $0x30] sm:$0xff]
    %v62 = vld [vmem:[%s0 + $0x38] sm:$0xff]
    %v63 = vld [vmem:[%s0 + $0x40] sm:$0xff]
    %v64 = vld [vmem:[%s0 + $0x48] sm:$0xff]
    %v65 = vld [vmem:[%s0 + $0x50] sm:$0xff]
    %v66 = vld [vmem:[%s0 + $0x58] sm:$0xff]
    %v67 = vld [vmem:[%s0 + $0x60] sm:$0xff]
    %v68 = vld [vmem:[%s0 + $0x68] sm:$0xff]
    %v69 = vld [vmem:[%s0 + $0x70] sm:$0xff]
    %v70 = vld [vmem:[%s0 + $0x78] sm:$0xff]
    %v71 = vld [vmem:[%s0 + $0x80] sm:$0xff]
    %v72 = vld [vmem:[%s0 + $0x88] sm:$0xff]
    %v73 = vld [vmem:[%s0 + $0x90] sm:$0xff]
    %v74 = vld [vmem:[%s0 + $0x98] sm:$0xff]
    %v75 = vld [vmem:[%s0 + $0xa0] sm:$0xff]
    %v76 = vld [vmem:[%s0 + $0xa8] sm:$0xff]
    %v77 = vld [vmem:[%s0 + $0xb0] sm:$0xff]
    %v78 = vld [vmem:[%s0 + $0xb8] sm:$0xff]
    %v79 = vld [vmem:[%s0 + $0xc0] sm:$0xff]
    %v80 = vld [vmem:[%s0 + $0xc8] sm:$0xff]
    %v81 = vld [vmem:[%s0 + $0xd0] sm:$0xff]
    %v82 = vld [vmem:[%s0 + $0xd8] sm:$0xff]
    %v83 = vld [vmem:[%s0 + $0xe0] sm:$0xff]
    %v84 = vld [vmem:[%s0 + $0xe8] sm:$0xff]
    %v85 = vld [vmem:[%s0 + $0xf0] sm:$0xff]
    %v86 = vld [vmem:[%s0 + $0xf8] sm:$0xff]
    %v87 = vld [vmem:[%s0 + $0x100] sm:$0xff]
    %v88 = vld [vmem:[%s0 + $0x108] sm:$0xff]
    %v89 = vld [vmem:[%s0 + $0x110] sm:$0xff]
    %v90 = vld [vmem:[%s0 + $0x118] sm:$0xff]
    %v91 = vld [vmem:[%s0 + $0x120] sm:$0xff]
    %v92 = vld [vmem:[%s0 + $0x128] sm:$0xff]
    %v93 = vld [vmem:[%s0 + $0x130] sm:$0xff]
    %v94 = vld [vmem:[%s0 + $0x138] sm:$0xff]
    %v95 = vld [vmem:[%s0 + $0x140] sm:$0xff]
    %v96 = vld [vmem:[%s0 + $0x148] sm:$0xff]
    %v97 = vld [vmem:[%s0 + $0x150] sm:$0xff]
    %v98 = vld [vmem:[%s0 + $0x158] sm:$0xff]
    %v99 = vld [vmem:[%s0 + $0x160] sm:$0xff]
    %v100 = vld [vmem:[%s0 + $0x168] sm:$0xff]
    %v101 = vld [vmem:[%s0 + $0x170] sm:$0xff]
    %v102 = vld [vmem:[%s0 + $0x178] sm:$0xff]
    %v103 = vld [vmem:[%s0 + $0x180] sm:$0xff]
    %v104 = vld [vmem:[%s0 + $0x188] sm:$0xff]
    %v105 = vld [vmem:[%s0 + $0x190] sm:$0xff]
    %v106 = vld [vmem:[%s0 + $0x198] sm:$0xff]
    %v107 = vld [vmem:[%s0 + $0x1a0] sm:$0xff]
    %v108 = vld [vmem:[%s0 + $0x1a8] sm:$0xff]
    %v109 = vld [vmem:[%s0 + $0x1b0] sm:$0xff]
    %v110 = vld [vmem:[%s0 + $0x1b8] sm:$0xff]
    %v111 = vld [vmem:[%s0 + $0x1c0] sm:$0xff]
    %v112 = vld [vmem:[%s0 + $0x1c8] sm:$0xff]
    %v113 = vld [vmem:[%s0 + $0x1d0] sm:$0xff]
    %v114 = vld [vmem:[%s0 + $0x1d8] sm:$0xff]
    %v115 = vld [vmem:[%s0 + $0x1e0] sm:$0xff]
    %v116 = vld [vmem:[%s0 + $0x1e8] sm:$0xff]
    %v117 = vld [vmem:[%s0 + $0x1f0] sm:$0xff]
    %v118 = vld [vmem:[%s0 + $0x1f8] sm:$0xff]
    %v119 = vld [vmem:[%s0 + $0x200] sm:$0xff]
    %v120 = vld [vmem:[%s0 + $0x208] sm:$0xff]
    %v121 = vld [vmem:[%s0 + $0x210] sm:$0xff]
    %v122 = vld [vmem:[%s0 + $0x218] sm:$0xff]
    %v123 = vld [vmem:[%s0 + $0x220] sm:$0xff]
    %v124 = vld [vmem:[%s0 + $0x228] sm:$0xff]
    %v125 = vld [vmem:[%s0 + $0x230] sm:$0xff]
    %v126 = vld [vmem:[%s0 + $0x238] sm:$0xff]
    %v127 = vld [vmem:[%s0 + $0x240] sm:$0xff]
    %v128 = vld [vmem:[%s0 + $0x248] sm:$0xff]
    %v129 = vld [vmem:[%s0 + $0x250] sm:$0xff]
    %v130 = vld [vmem:[%s0 + $0x258] sm:$0xff]
    %v131 = vld [vmem:[%s0 + $0x260] sm:$0xff]
    %v132 = vld [vmem:[%s0 + $0x268] sm:$0xff]
    %v133 = vld [vmem:[%s0 + $0x270] sm:$0xff]
    %v134 = vld [vmem:[%s0 + $0x278] sm:$0xff]
    %v135 = vld [vmem:[%s0 + $0x280] sm:$0xff]
    %v136 = vld [vmem:[%s0 + $0x288] sm:$0xff]
    %v137 = vld [vmem:[%s0 + $0x290] sm:$0xff]
    %v138 = vld [vmem:[%s0 + $0x298] sm:$0xff]
    %v139 = vld [vmem:[%s0 + $0x2a0] sm:$0xff]
    %v140 = vld [vmem:[%s0 + $0x2a8] sm:$0xff]
    %v141 = vld [vmem:[%s0 + $0x2b0] sm:$0xff]
    %v142 = vld [vmem:[%s0 + $0x2b8] sm:$0xff]
    %v143 = vld [vmem:[%s0 + $0x2c0] sm:$0xff]
    %v144 = vld [vmem:[%s0 + $0x2c8] sm:$0xff]
    %v145 = vld [vmem:[%s0 + $0x2d0] sm:$0xff]
    %v146 = vld [vmem:[%s0 + $0x2d8] sm:$0xff]
    %v147 = vld [vmem:[%s0 + $0x2e0] sm:$0xff]
    %v148 = vld [vmem:[%s0 + $0x2e8] sm:$0xff]
    %v149 = vld [vmem:[%s0 + $0x2f0] sm:$0xff]
    %v150 = vld [vmem:[%s0 + $0x2f8] sm:$0xff]
    %v151 = vld [vmem:[%s0 + $0x300] sm:$0xff]
    %v152 = vld [vmem:[%s0 + $0x308] sm:$0xff]
    %v153 = vld [vmem:[%s0 + $0x310] sm:$0xff]
    %v154 = vld [vmem:[%s0 + $0x318] sm:$0xff]
    %v155 = vld [vmem:[%s0 + $0x320] sm:$0xff]
    %v156 = vld [vmem:[%s0 + $0x328] sm:$0xff]
    %v157 = vld [vmem:[%s0 + $0x330] sm:$0xff]
    %v158 = vld [vmem:[%s0 + $0x338] sm:$0xff]
    %v159 = vld [vmem:[%s0 + $0x340] sm:$0xff]
    %v160 = vld [vmem:[%s0 + $0x348] sm:$0xff]
    %v161 = vld [vmem:[%s0 + $0x350] sm:$0xff]
    %v162 = vld [vmem:[%s0 + $0x358] sm:$0xff]
    %v163 = vld [vmem:[%s0 + $0x360] sm:$0xf]
    %v164 = vld [vmem:[%s0 + $0x368] sm:$0xf]
    %v165 = vld [vmem:[%s0 + $0x370] sm:$0xf]
    %v166 = vld [vmem:[%s0 + $0x378] sm:$0xf]
    %v167 = vld [vmem:[%s0 + $0x380] sm:$0xf]
    %v168 = vld [vmem:[%s0 + $0x388] sm:$0xf]
    %v169 = vld [vmem:[%s0 + $0x390] sm:$0xf]
    %v170 = vld [vmem:[%s0 + $0x398] sm:$0xf]
    %v171 = vld [vmem:[%s0 + $0x3a0] sm:$0xf]
    %v172 = vld [vmem:[%s2] sm:$0xff]
    %174 = vset.pattern.permute.xlu0 0
    %175 = vperm.xlu0 %174, %v172
    %v176 = vpop.permute.xlu0 %175
    %vm178 = vcmask 818176
    %v180 = vsel %vm178, %v54, 0
    %vm182 = vcmask 1043456
    %v184 = vsel %vm182, %v163, 0
    %v187 = vsel %vm182, %v164, 0
    %v190 = vsel %vm182, %v165, 0
    %v193 = vsel %vm182, %v166, 0
    %v196 = vsel %vm182, %v167, 0
    %v199 = vsel %vm182, %v168, 0
    %v202 = vsel %vm182, %v169, 0
    %v205 = vsel %vm182, %v170, 0
    %v208 = vsel %vm182, %v171, 0
    %210 = vmatprep.subr.mxu0 %v56
    %211 = vmatpush1.msra.mxu0 %v55
    %212 = vmatprep.subr.mxu0 %v65
    %213 = vmatpush1.msra.mxu0 %v64
    %214 = vmatprep.subr.mxu0 %v74
    %215 = vmatpush1.msra.mxu0 %v73
    %216 = vmatprep.subr.mxu0 %v83
    %217 = vmatpush1.msra.mxu0 %v82
    %218 = vmatprep.subr.mxu0 %v92
    %219 = vmatpush1.msra.mxu0 %v91
    %220 = vmatprep.subr.mxu0 %v101
    %221 = vmatpush1.msra.mxu0 %v100
    %222 = vmatprep.subr.mxu0 %v110
    %223 = vmatpush1.msra.mxu0 %v109
    %224 = vmatprep.subr.mxu0 %v119
    %225 = vmatpush1.msra.mxu0 %v118
    %226 = vmatprep.subr.mxu0 %v128
    %227 = vmatpush1.msra.mxu0 %v127
    %228 = vmatprep.subr.mxu0 %v137
    %229 = vmatpush1.msra.mxu0 %v136
    %230 = vmatprep.subr.mxu0 %v146
    %231 = vmatpush1.msra.mxu0 %v145
    %232 = vmatprep.subr.mxu0 %v155
    %233 = vmatpush1.msra.mxu0 %v154
    %234 = vmatprep.subr.mxu0 %v187
    %235 = vmatpush1.msra.mxu0 %v184
    %236 = vmatprep.subr.mxu0 0.0
    %237 = vmatpush1.msra.mxu0 0.0
    %238 = vmatprep.subr.mxu0 0.0
    %239 = vmatpush1.msra.mxu0 0.0
    %240 = vmatprep.subr.mxu0 0.0
    %241 = vmatpush1.msra.mxu0 0.0
    %242 = vmatprep.subr.mxu0 0.0
    %243 = vmatpush1.msra.mxu0 0.0
    %244 = vmatprep.subr.mxu0 0.0
    %245 = vmatpush1.msra.mxu0 0.0
    %246 = vmatprep.subr.mxu0 0.0
    %247 = vmatpush1.msra.mxu0 0.0
    %248 = vmatprep.subr.mxu0 0.0
    %249 = vmatpush1.msra.mxu0 0.0
    %250 = vmatprep.subr.mxu0 0.0
    %251 = vmatpush1.msra.mxu0 0.0
    %252 = vmatprep.subr.mxu0 0.0
    %253 = vmatpush1.msra.mxu0 0.0
    %254 = vmatprep.subr.mxu0 0.0
    %255 = vmatpush1.msra.mxu0 0.0
    %256 = vmatprep.subr.mxu0 0.0
    %257 = vmatpush1.msra.mxu0 0.0
    %258 = vmatprep.subr.mxu0 0.0
    %259 = vmatpush1.msra.mxu0 0.0
    %260 = vmatprep.subr.mxu0 0.0
    %261 = vmatpush1.msra.mxu0 0.0
    %262 = vmatprep.subr.mxu0 0.0
    %263 = vmatpush1.msra.mxu0 0.0
    %264 = vmatprep.subr.mxu0 0.0
    %265 = vmatpush1.msra.mxu0 0.0
    %266 = vmatprep.subr.mxu0 0.0
    %267 = vmatpush1.msra.mxu0 0.0
    %268 = vmatprep.subr.mxu0 0.0
    %269 = vmatpush1.msra.mxu0 0.0
    %270 = vmatprep.subr.mxu0 0.0
    %271 = vmatpush1.msra.mxu0 0.0
    %272 = vmatprep.subr.mxu0 0.0
    %273 = vmatpush1.msra.mxu0 0.0
    %274 = vmatprep.mubr.f32.mxu0 0.0
    %275 = vmatmul.mubr.f32.gmra.mrb[0].mxu0 %v180
    %v276 = vpop.f32.mrb[0].mxu0
    %v277 = vadd.f32 %v176, %v276
    %v278 = vpop.f32.mrb[0].mxu0
    %v279 = vadd.f32 %v176, %v278
    %280 = vdwg.mxu0
    %281 = vmatprep.subr.mxu0 %v58
    %282 = vmatpush1.msra.mxu0 %v57
    %283 = vmatprep.subr.mxu0 %v67
    %284 = vmatpush1.msra.mxu0 %v66
    %285 = vmatprep.subr.mxu0 %v76
    %286 = vmatpush1.msra.mxu0 %v75
    %287 = vmatprep.subr.mxu0 %v85
    %288 = vmatpush1.msra.mxu0 %v84
    %289 = vmatprep.subr.mxu0 %v94
    %290 = vmatpush1.msra.mxu0 %v93
    %291 = vmatprep.subr.mxu0 %v103
    %292 = vmatpush1.msra.mxu0 %v102
    %293 = vmatprep.subr.mxu0 %v112
    %294 = vmatpush1.msra.mxu0 %v111
    %295 = vmatprep.subr.mxu0 %v121
    %296 = vmatpush1.msra.mxu0 %v120
    %297 = vmatprep.subr.mxu0 %v130
    %298 = vmatpush1.msra.mxu0 %v129
    %299 = vmatprep.subr.mxu0 %v139
    %300 = vmatpush1.msra.mxu0 %v138
    %301 = vmatprep.subr.mxu0 %v148
    %302 = vmatpush1.msra.mxu0 %v147
    %303 = vmatprep.subr.mxu0 %v157
    %304 = vmatpush1.msra.mxu0 %v156
    %305 = vmatprep.subr.mxu0 %v193
    %306 = vmatpush1.msra.mxu0 %v190
    %307 = vmatprep.subr.mxu0 0.0
    %308 = vmatpush1.msra.mxu0 0.0
    %309 = vmatprep.subr.mxu0 0.0
    %310 = vmatpush1.msra.mxu0 0.0
    %311 = vmatprep.subr.mxu0 0.0
    %312 = vmatpush1.msra.mxu0 0.0
    %313 = vmatprep.subr.mxu0 0.0
    %314 = vmatpush1.msra.mxu0 0.0
    %315 = vmatprep.subr.mxu0 0.0
    %316 = vmatpush1.msra.mxu0 0.0
    %317 = vmatprep.subr.mxu0 0.0
    %318 = vmatpush1.msra.mxu0 0.0
    %319 = vmatprep.subr.mxu0 0.0
    %320 = vmatpush1.msra.mxu0 0.0
    %321 = vmatprep.subr.mxu0 0.0
    %322 = vmatpush1.msra.mxu0 0.0
    %323 = vmatprep.subr.mxu0 0.0
    %324 = vmatpush1.msra.mxu0 0.0
    %325 = vmatprep.subr.mxu0 0.0
    %326 = vmatpush1.msra.mxu0 0.0
    %327 = vmatprep.subr.mxu0 0.0
    %328 = vmatpush1.msra.mxu0 0.0
    %329 = vmatprep.subr.mxu0 0.0
    %330 = vmatpush1.msra.mxu0 0.0
    %331 = vmatprep.subr.mxu0 0.0
    %332 = vmatpush1.msra.mxu0 0.0
    %333 = vmatprep.subr.mxu0 0.0
    %334 = vmatpush1.msra.mxu0 0.0
    %335 = vmatprep.subr.mxu0 0.0
    %336 = vmatpush1.msra.mxu0 0.0
    %337 = vmatprep.subr.mxu0 0.0
    %338 = vmatpush1.msra.mxu0 0.0
    %339 = vmatprep.subr.mxu0 0.0
    %340 = vmatpush1.msra.mxu0 0.0
    %341 = vmatprep.subr.mxu0 0.0
    %342 = vmatpush1.msra.mxu0 0.0
    %343 = vmatprep.subr.mxu0 0.0
    %344 = vmatpush1.msra.mxu0 0.0
    %345 = vmatprep.mubr.f32.mxu0 0.0
    %346 = vmatmul.mubr.f32.gmra.mrb[0].mxu0 %v180
    %v347 = vpop.f32.mrb[0].mxu0
    %v348 = vadd.f32 %v176, %v347
    %v349 = vpop.f32.mrb[0].mxu0
    %v350 = vadd.f32 %v176, %v349
    %351 = vdwg.mxu0
    %352 = vmatprep.subr.mxu0 %v60
    %353 = vmatpush1.msra.mxu0 %v59
    %354 = vmatprep.subr.mxu0 %v69
    %355 = vmatpush1.msra.mxu0 %v68
    %356 = vmatprep.subr.mxu0 %v78
    %357 = vmatpush1.msra.mxu0 %v77
    %358 = vmatprep.subr.mxu0 %v87
    %359 = vmatpush1.msra.mxu0 %v86
    %360 = vmatprep.subr.mxu0 %v96
    %361 = vmatpush1.msra.mxu0 %v95
    %362 = vmatprep.subr.mxu0 %v105
    %363 = vmatpush1.msra.mxu0 %v104
    %364 = vmatprep.subr.mxu0 %v114
    %365 = vmatpush1.msra.mxu0 %v113
    %366 = vmatprep.subr.mxu0 %v123
    %367 = vmatpush1.msra.mxu0 %v122
    %368 = vmatprep.subr.mxu0 %v132
    %369 = vmatpush1.msra.mxu0 %v131
    %370 = vmatprep.subr.mxu0 %v141
    %371 = vmatpush1.msra.mxu0 %v140
    %372 = vmatprep.subr.mxu0 %v150
    %373 = vmatpush1.msra.mxu0 %v149
    %374 = vmatprep.subr.mxu0 %v159
    %375 = vmatpush1.msra.mxu0 %v158
    %376 = vmatprep.subr.mxu0 %v199
    %377 = vmatpush1.msra.mxu0 %v196
    %378 = vmatprep.subr.mxu0 0.0
    %379 = vmatpush1.msra.mxu0 0.0
    %380 = vmatprep.subr.mxu0 0.0
    %381 = vmatpush1.msra.mxu0 0.0
    %382 = vmatprep.subr.mxu0 0.0
    %383 = vmatpush1.msra.mxu0 0.0
    %384 = vmatprep.subr.mxu0 0.0
    %385 = vmatpush1.msra.mxu0 0.0
    %386 = vmatprep.subr.mxu0 0.0
    %387 = vmatpush1.msra.mxu0 0.0
    %388 = vmatprep.subr.mxu0 0.0
    %389 = vmatpush1.msra.mxu0 0.0
    %390 = vmatprep.subr.mxu0 0.0
    %391 = vmatpush1.msra.mxu0 0.0
    %392 = vmatprep.subr.mxu0 0.0
    %393 = vmatpush1.msra.mxu0 0.0
    %394 = vmatprep.subr.mxu0 0.0
    %395 = vmatpush1.msra.mxu0 0.0
    %396 = vmatprep.subr.mxu0 0.0
    %397 = vmatpush1.msra.mxu0 0.0
    %398 = vmatprep.subr.mxu0 0.0
    %399 = vmatpush1.msra.mxu0 0.0
    %400 = vmatprep.subr.mxu0 0.0
    %401 = vmatpush1.msra.mxu0 0.0
    %402 = vmatprep.subr.mxu0 0.0
    %403 = vmatpush1.msra.mxu0 0.0
    %404 = vmatprep.subr.mxu0 0.0
    %405 = vmatpush1.msra.mxu0 0.0
    %406 = vmatprep.subr.mxu0 0.0
    %407 = vmatpush1.msra.mxu0 0.0
    %408 = vmatprep.subr.mxu0 0.0
    %409 = vmatpush1.msra.mxu0 0.0
    %410 = vmatprep.subr.mxu0 0.0
    %411 = vmatpush1.msra.mxu0 0.0
    %412 = vmatprep.subr.mxu0 0.0
    %413 = vmatpush1.msra.mxu0 0.0
    %414 = vmatprep.subr.mxu0 0.0
    %415 = vmatpush1.msra.mxu0 0.0
    %416 = vmatprep.mubr.f32.mxu0 0.0
    %417 = vmatmul.mubr.f32.gmra.mrb[0].mxu0 %v180
    %v418 = vpop.f32.mrb[0].mxu0
    %v419 = vadd.f32 %v176, %v418
    %v420 = vpop.f32.mrb[0].mxu0
    %v421 = vadd.f32 %v176, %v420
    %422 = vdwg.mxu0
    %423 = vmatprep.subr.mxu0 %v62
    %424 = vmatpush1.msra.mxu0 %v61
    %425 = vmatprep.subr.mxu0 %v71
    %426 = vmatpush1.msra.mxu0 %v70
    %427 = vmatprep.subr.mxu0 %v80
    %428 = vmatpush1.msra.mxu0 %v79
    %429 = vmatprep.subr.mxu0 %v89
    %430 = vmatpush1.msra.mxu0 %v88
    %431 = vmatprep.subr.mxu0 %v98
    %432 = vmatpush1.msra.mxu0 %v97
    %433 = vmatprep.subr.mxu0 %v107
    %434 = vmatpush1.msra.mxu0 %v106
    %435 = vmatprep.subr.mxu0 %v116
    %436 = vmatpush1.msra.mxu0 %v115
    %437 = vmatprep.subr.mxu0 %v125
    %438 = vmatpush1.msra.mxu0 %v124
    %439 = vmatprep.subr.mxu0 %v134
    %440 = vmatpush1.msra.mxu0 %v133
    %441 = vmatprep.subr.mxu0 %v143
    %442 = vmatpush1.msra.mxu0 %v142
    %443 = vmatprep.subr.mxu0 %v152
    %444 = vmatpush1.msra.mxu0 %v151
    %445 = vmatprep.subr.mxu0 %v161
    %446 = vmatpush1.msra.mxu0 %v160
    %447 = vmatprep.subr.mxu0 %v205
    %448 = vmatpush1.msra.mxu0 %v202
    %449 = vmatprep.subr.mxu0 0.0
    %450 = vmatpush1.msra.mxu0 0.0
    %451 = vmatprep.subr.mxu0 0.0
    %452 = vmatpush1.msra.mxu0 0.0
    %453 = vmatprep.subr.mxu0 0.0
    %454 = vmatpush1.msra.mxu0 0.0
    %455 = vmatprep.subr.mxu0 0.0
    %456 = vmatpush1.msra.mxu0 0.0
    %457 = vmatprep.subr.mxu0 0.0
    %458 = vmatpush1.msra.mxu0 0.0
    %459 = vmatprep.subr.mxu0 0.0
    %460 = vmatpush1.msra.mxu0 0.0
    %461 = vmatprep.subr.mxu0 0.0
    %462 = vmatpush1.msra.mxu0 0.0
    %463 = vmatprep.subr.mxu0 0.0
    %464 = vmatpush1.msra.mxu0 0.0
    %465 = vmatprep.subr.mxu0 0.0
    %466 = vmatpush1.msra.mxu0 0.0
    %467 = vmatprep.subr.mxu0 0.0
    %468 = vmatpush1.msra.mxu0 0.0
    %469 = vmatprep.subr.mxu0 0.0
    %470 = vmatpush1.msra.mxu0 0.0
    %471 = vmatprep.subr.mxu0 0.0
    %472 = vmatpush1.msra.mxu0 0.0
    %473 = vmatprep.subr.mxu0 0.0
    %474 = vmatpush1.msra.mxu0 0.0
    %475 = vmatprep.subr.mxu0 0.0
    %476 = vmatpush1.msra.mxu0 0.0
    %477 = vmatprep.subr.mxu0 0.0
    %478 = vmatpush1.msra.mxu0 0.0
    %479 = vmatprep.subr.mxu0 0.0
    %480 = vmatpush1.msra.mxu0 0.0
    %481 = vmatprep.subr.mxu0 0.0
    %482 = vmatpush1.msra.mxu0 0.0
    %483 = vmatprep.subr.mxu0 0.0
    %484 = vmatpush1.msra.mxu0 0.0
    %485 = vmatprep.subr.mxu0 0.0
    %486 = vmatpush1.msra.mxu0 0.0
    %487 = vmatprep.mubr.f32.mxu0 0.0
    %488 = vmatmul.mubr.f32.gmra.mrb[0].mxu0 %v180
    %v489 = vpop.f32.mrb[0].mxu0
    %v490 = vadd.f32 %v176, %v489
    %v491 = vpop.f32.mrb[0].mxu0
    %v492 = vadd.f32 %v176, %v491
    %493 = vdwg.mxu0
    %494 = vmatprep.subr.mxu0 0.0
    %495 = vmatpush1.msra.mxu0 %v63
    %496 = vmatprep.subr.mxu0 0.0
    %497 = vmatpush1.msra.mxu0 %v72
    %498 = vmatprep.subr.mxu0 0.0
    %499 = vmatpush1.msra.mxu0 %v81
    %500 = vmatprep.subr.mxu0 0.0
    %501 = vmatpush1.msra.mxu0 %v90
    %502 = vmatprep.subr.mxu0 0.0
    %503 = vmatpush1.msra.mxu0 %v99
    %504 = vmatprep.subr.mxu0 0.0
    %505 = vmatpush1.msra.mxu0 %v108
    %506 = vmatprep.subr.mxu0 0.0
    %507 = vmatpush1.msra.mxu0 %v117
    %508 = vmatprep.subr.mxu0 0.0
    %509 = vmatpush1.msra.mxu0 %v126
    %510 = vmatprep.subr.mxu0 0.0
    %511 = vmatpush1.msra.mxu0 %v135
    %512 = vmatprep.subr.mxu0 0.0
    %513 = vmatpush1.msra.mxu0 %v144
    %514 = vmatprep.subr.mxu0 0.0
    %515 = vmatpush1.msra.mxu0 %v153
    %516 = vmatprep.subr.mxu0 0.0
    %517 = vmatpush1.msra.mxu0 %v162
    %518 = vmatprep.subr.mxu0 0.0
    %519 = vmatpush1.msra.mxu0 %v208
    %520 = vmatprep.subr.mxu0 0.0
    %521 = vmatpush1.msra.mxu0 0.0
    %522 = vmatprep.subr.mxu0 0.0
    %523 = vmatpush1.msra.mxu0 0.0
    %524 = vmatprep.subr.mxu0 0.0
    %525 = vmatpush1.msra.mxu0 0.0
    %526 = vmatprep.subr.mxu0 0.0
    %527 = vmatpush1.msra.mxu0 0.0
    %528 = vmatprep.subr.mxu0 0.0
    %529 = vmatpush1.msra.mxu0 0.0
    %530 = vmatprep.subr.mxu0 0.0
    %531 = vmatpush1.msra.mxu0 0.0
    %532 = vmatprep.subr.mxu0 0.0
    %533 = vmatpush1.msra.mxu0 0.0
    %534 = vmatprep.subr.mxu0 0.0
    %535 = vmatpush1.msra.mxu0 0.0
    %536 = vmatprep.subr.mxu0 0.0
    %537 = vmatpush1.msra.mxu0 0.0
    %538 = vmatprep.subr.mxu0 0.0
    %539 = vmatpush1.msra.mxu0 0.0
    %540 = vmatprep.subr.mxu0 0.0
    %541 = vmatpush1.msra.mxu0 0.0
    %542 = vmatprep.subr.mxu0 0.0
    %543 = vmatpush1.msra.mxu0 0.0
    %544 = vmatprep.subr.mxu0 0.0
    %545 = vmatpush1.msra.mxu0 0.0
    %546 = vmatprep.subr.mxu0 0.0
    %547 = vmatpush1.msra.mxu0 0.0
    %548 = vmatprep.subr.mxu0 0.0
    %549 = vmatpush1.msra.mxu0 0.0
    %550 = vmatprep.subr.mxu0 0.0
    %551 = vmatpush1.msra.mxu0 0.0
    %552 = vmatprep.subr.mxu0 0.0
    %553 = vmatpush1.msra.mxu0 0.0
    %554 = vmatprep.subr.mxu0 0.0
    %555 = vmatpush1.msra.mxu0 0.0
    %556 = vmatprep.subr.mxu0 0.0
    %557 = vmatpush1.msra.mxu0 0.0
    %558 = vmatprep.mubr.f32.mxu0 0.0
    %559 = vmatmul.mubr.f32.gmra.mrb[0].mxu0 %v180
    %v560 = vpop.f32.mrb[0].mxu0
    %v561 = vadd.f32 %v176, %v560
    %v562 = vpop.f32.mrb[0].mxu0
    %563 = vdwg.mxu0
    %v564 = vmax.f32 %v277, 0.0
    %v565 = vmax.f32 %v279, 0.0
    %v566 = vmax.f32 %v348, 0.0
    %v567 = vmax.f32 %v350, 0.0
    %v568 = vmax.f32 %v419, 0.0
    %v569 = vmax.f32 %v421, 0.0
    %v570 = vmax.f32 %v490, 0.0
    %v571 = vmax.f32 %v492, 0.0
    %v572 = vmax.f32 %v561, 0.0
    %v573 = vld [vmem:[%s3] sm:$0xff]
    %575 = vset.pattern.permute.xlu0 0
    %576 = vperm.xlu0 %575, %v573
    %v577 = vpop.permute.xlu0 %576
    %v579 = vmul.f32 %v564, %v577
    %v580 = vmul.f32 %v565, %v577
    %v581 = vmul.f32 %v566, %v577
    %v582 = vmul.f32 %v567, %v577
    %v583 = vmul.f32 %v568, %v577
    %v584 = vmul.f32 %v569, %v577
    %v585 = vmul.f32 %v570, %v577
    %v586 = vmul.f32 %v571, %v577
    %v587 = vmul.f32 %v572, %v577
    %v588 = vld [vmem:[%s4] sm:$0xff]
    %590 = vset.pattern.permute.xlu0 0
    %591 = vperm.xlu0 %590, %v588
    %v592 = vpop.permute.xlu0 %591
    %v594 = vadd.f32 %v579, %v592
    %v595 = vadd.f32 %v580, %v592
    %v596 = vadd.f32 %v581, %v592
    %v597 = vadd.f32 %v582, %v592
    %v598 = vadd.f32 %v583, %v592
    %v599 = vadd.f32 %v584, %v592
    %v600 = vadd.f32 %v585, %v592
    %v601 = vadd.f32 %v586, %v592
    %v602 = vadd.f32 %v587, %v592
    %606 = vrot.lane.b32.xlu0 %v596, 96
    %v607 = vpop.permute.xlu0 %606
    %608 = vrot.lane.b32.xlu0 %v597, 96
    %v609 = vpop.permute.xlu0 %608
    %610 = vrot.lane.b32.xlu0 %v598, 96
    %v611 = vpop.permute.xlu0 %610
    %vm612 = vcmask 785408
    %v613 = vsel %vm612, %v607, %v609
    %v614 = vsel %vm612, %v609, %v611
    %v618 = vmax.f32 %v594, %v613
    %v619 = vmax.f32 %v595, %v614
    %v620 = vmax.f32 %v596, %v611
    %624 = vrot.lane.b32.xlu0 %v600, 96
    %v625 = vpop.permute.xlu0 %624
    %626 = vrot.lane.b32.xlu0 %v601, 96
    %v627 = vpop.permute.xlu0 %626
    %628 = vrot.lane.b32.xlu0 %v602, 96
    %v629 = vpop.permute.xlu0 %628
    %v630 = vsel %vm612, %v625, %v627
    %v631 = vsel %vm612, %v627, %v629
    %v635 = vmax.f32 %v598, %v630
    %v636 = vmax.f32 %v599, %v631
    %v637 = vmax.f32 %v600, %v629
    %641 = vrot.lane.b32.xlu0 %v635, 64
    %v642 = vpop.permute.xlu0 %641
    %643 = vrot.lane.b32.xlu0 %v636, 64
    %v644 = vpop.permute.xlu0 %643
    %645 = vrot.lane.b32.xlu0 %v637, 64
    %v646 = vpop.permute.xlu0 %645
    %vm647 = vcmask 523264
    %v648 = vsel %vm647, %v642, %v644
    %v649 = vsel %vm647, %v644, %v646
    %v653 = vmax.f32 %v618, %v648
    %v654 = vmax.f32 %v619, %v649
    %v655 = vmax.f32 %v620, %v646
    %vm656 = vcmask 261120
    %v657 = vsel %vm656, %v655, 0.0
    %661 = vrot.lane.b32.xlu0 %v653, 127
    %v662 = vpop.permute.xlu0 %661
    %663 = vrot.lane.b32.xlu0 %v654, 127
    %v664 = vpop.permute.xlu0 %663
    %665 = vrot.lane.b32.xlu0 %v657, 127
    %v666 = vpop.permute.xlu0 %665
    %vm667 = vcmask 1039360
    %v668 = vsel %vm667, %v662, %v664
    %v669 = vsel %vm667, %v664, %v666
    %673 = vrot.lane.b32.xlu0 %v653, 126
    %v674 = vpop.permute.xlu0 %673
    %675 = vrot.lane.b32.xlu0 %v654, 126
    %v676 = vpop.permute.xlu0 %675
    %677 = vrot.lane.b32.xlu0 %v657, 126
    %v678 = vpop.permute.xlu0 %677
    %vm679 = vcmask 1031168
    %v680 = vsel %vm679, %v674, %v676
    %v681 = vsel %vm679, %v676, %v678
    %685 = vrot.lane.b32.xlu0 %v653, 125
    %v686 = vpop.permute.xlu0 %685
    %687 = vrot.lane.b32.xlu0 %v654, 125
    %v688 = vpop.permute.xlu0 %687
    %689 = vrot.lane.b32.xlu0 %v657, 125
    %v690 = vpop.permute.xlu0 %689
    %vm691 = vcmask 1022976
    %v692 = vsel %vm691, %v686, %v688
    %v693 = vsel %vm691, %v688, %v690
    %697 = vrot.lane.b32.xlu0 %v653, 124
    %v698 = vpop.permute.xlu0 %697
    %699 = vrot.lane.b32.xlu0 %v654, 124
    %v700 = vpop.permute.xlu0 %699
    %701 = vrot.lane.b32.xlu0 %v657, 124
    %v702 = vpop.permute.xlu0 %701
    %vm703 = vcmask 1014784
    %v704 = vsel %vm703, %v698, %v700
    %v705 = vsel %vm703, %v700, %v702
    %709 = vrot.lane.b32.xlu0 %v653, 116
    %v710 = vpop.permute.xlu0 %709
    %711 = vrot.lane.b32.xlu0 %v654, 116
    %v712 = vpop.permute.xlu0 %711
    %713 = vrot.lane.b32.xlu0 %v657, 116
    %v714 = vpop.permute.xlu0 %713
    %vm715 = vcmask 949248
    %v716 = vsel %vm715, %v710, %v712
    %v717 = vsel %vm715, %v712, %v714
    %721 = vrot.lane.b32.xlu0 %v653, 115
    %v722 = vpop.permute.xlu0 %721
    %723 = vrot.lane.b32.xlu0 %v654, 115
    %v724 = vpop.permute.xlu0 %723
    %725 = vrot.lane.b32.xlu0 %v657, 115
    %v726 = vpop.permute.xlu0 %725
    %vm727 = vcmask 941056
    %v728 = vsel %vm727, %v722, %v724
    %v729 = vsel %vm727, %v724, %v726
    %733 = vrot.lane.b32.xlu0 %v653, 114
    %v734 = vpop.permute.xlu0 %733
    %735 = vrot.lane.b32.xlu0 %v654, 114
    %v736 = vpop.permute.xlu0 %735
    %737 = vrot.lane.b32.xlu0 %v657, 114
    %v738 = vpop.permute.xlu0 %737
    %vm739 = vcmask 932864
    %v740 = vsel %vm739, %v734, %v736
    %v741 = vsel %vm739, %v736, %v738
    %745 = vrot.lane.b32.xlu0 %v653, 113
    %v746 = vpop.permute.xlu0 %745
    %747 = vrot.lane.b32.xlu0 %v654, 113
    %v748 = vpop.permute.xlu0 %747
    %749 = vrot.lane.b32.xlu0 %v657, 113
    %v750 = vpop.permute.xlu0 %749
    %vm751 = vcmask 924672
    %v752 = vsel %vm751, %v746, %v748
    %v753 = vsel %vm751, %v748, %v750
    %757 = vrot.lane.b32.xlu0 %v653, 112
    %v758 = vpop.permute.xlu0 %757
    %759 = vrot.lane.b32.xlu0 %v654, 112
    %v760 = vpop.permute.xlu0 %759
    %761 = vrot.lane.b32.xlu0 %v657, 112
    %v762 = vpop.permute.xlu0 %761
    %vm763 = vcmask 916480
    %v764 = vsel %vm763, %v758, %v760
    %v765 = vsel %vm763, %v760, %v762
    %769 = vrot.lane.b32.xlu0 %v653, 104
    %v770 = vpop.permute.xlu0 %769
    %771 = vrot.lane.b32.xlu0 %v654, 104
    %v772 = vpop.permute.xlu0 %771
    %773 = vrot.lane.b32.xlu0 %v657, 104
    %v774 = vpop.permute.xlu0 %773
    %vm775 = vcmask 850944
    %v776 = vsel %vm775, %v770, %v772
    %v777 = vsel %vm775, %v772, %v774
    %781 = vrot.lane.b32.xlu0 %v653, 103
    %v782 = vpop.permute.xlu0 %781
    %783 = vrot.lane.b32.xlu0 %v654, 103
    %v784 = vpop.permute.xlu0 %783
    %785 = vrot.lane.b32.xlu0 %v657, 103
    %v786 = vpop.permute.xlu0 %785
    %vm787 = vcmask 842752
    %v788 = vsel %vm787, %v782, %v784
    %v789 = vsel %vm787, %v784, %v786
    %793 = vrot.lane.b32.xlu0 %v653, 102
    %v794 = vpop.permute.xlu0 %793
    %795 = vrot.lane.b32.xlu0 %v654, 102
    %v796 = vpop.permute.xlu0 %795
    %797 = vrot.lane.b32.xlu0 %v657, 102
    %v798 = vpop.permute.xlu0 %797
    %vm799 = vcmask 834560
    %v800 = vsel %vm799, %v794, %v796
    %v801 = vsel %vm799, %v796, %v798
    %805 = vrot.lane.b32.xlu0 %v653, 101
    %v806 = vpop.permute.xlu0 %805
    %807 = vrot.lane.b32.xlu0 %v654, 101
    %v808 = vpop.permute.xlu0 %807
    %809 = vrot.lane.b32.xlu0 %v657, 101
    %v810 = vpop.permute.xlu0 %809
    %vm811 = vcmask 826368
    %v812 = vsel %vm811, %v806, %v808
    %v813 = vsel %vm811, %v808, %v810
    %817 = vrot.lane.b32.xlu0 %v653, 100
    %v818 = vpop.permute.xlu0 %817
    %819 = vrot.lane.b32.xlu0 %v654, 100
    %v820 = vpop.permute.xlu0 %819
    %821 = vrot.lane.b32.xlu0 %v657, 100
    %v822 = vpop.permute.xlu0 %821
    %v823 = vsel %vm178, %v818, %v820
    %v824 = vsel %vm178, %v820, %v822
    %828 = vrot.lane.b32.xlu0 %v653, 92
    %v829 = vpop.permute.xlu0 %828
    %830 = vrot.lane.b32.xlu0 %v654, 92
    %v831 = vpop.permute.xlu0 %830
    %832 = vrot.lane.b32.xlu0 %v657, 92
    %v833 = vpop.permute.xlu0 %832
    %vm834 = vcmask 752640
    %v835 = vsel %vm834, %v829, %v831
    %v836 = vsel %vm834, %v831, %v833
    %840 = vrot.lane.b32.xlu0 %v653, 117
    %v841 = vpop.permute.xlu0 %840
    %842 = vrot.lane.b32.xlu0 %v654, 117
    %v843 = vpop.permute.xlu0 %842
    %844 = vrot.lane.b32.xlu0 %v657, 117
    %v845 = vpop.permute.xlu0 %844
    %vm846 = vcmask 957440
    %v847 = vsel %vm846, %v841, %v843
    %v848 = vsel %vm846, %v843, %v845
    %849 = vrot.lane.b32.xlu0 %v653, 91
    %v850 = vpop.permute.xlu0 %849
    %851 = vrot.lane.b32.xlu0 %v654, 91
    %v852 = vpop.permute.xlu0 %851
    %853 = vrot.lane.b32.xlu0 %v657, 91
    %v854 = vpop.permute.xlu0 %853
    %855 = vrot.lane.b32.xlu0 %v668, 91
    %v856 = vpop.permute.xlu0 %855
    %857 = vrot.lane.b32.xlu0 %v669, 91
    %v858 = vpop.permute.xlu0 %857
    %859 = vrot.lane.b32.xlu0 %v666, 91
    %v860 = vpop.permute.xlu0 %859
    %861 = vrot.lane.b32.xlu0 %v680, 91
    %v862 = vpop.permute.xlu0 %861
    %863 = vrot.lane.b32.xlu0 %v681, 91
    %v864 = vpop.permute.xlu0 %863
    %865 = vrot.lane.b32.xlu0 %v678, 91
    %v866 = vpop.permute.xlu0 %865
    %867 = vrot.lane.b32.xlu0 %v692, 91
    %v868 = vpop.permute.xlu0 %867
    %869 = vrot.lane.b32.xlu0 %v693, 91
    %v870 = vpop.permute.xlu0 %869
    %871 = vrot.lane.b32.xlu0 %v690, 91
    %v872 = vpop.permute.xlu0 %871
    %873 = vrot.lane.b32.xlu0 %v847, 91
    %v874 = vpop.permute.xlu0 %873
    %875 = vrot.lane.b32.xlu0 %v848, 91
    %v876 = vpop.permute.xlu0 %875
    %877 = vrot.lane.b32.xlu0 %v845, 91
    %v878 = vpop.permute.xlu0 %877
    %879 = vrot.lane.b32.xlu0 %v716, 91
    %v880 = vpop.permute.xlu0 %879
    %881 = vrot.lane.b32.xlu0 %v717, 91
    %v882 = vpop.permute.xlu0 %881
    %883 = vrot.lane.b32.xlu0 %v714, 91
    %v884 = vpop.permute.xlu0 %883
    %885 = vrot.lane.b32.xlu0 %v728, 91
    %v886 = vpop.permute.xlu0 %885
    %887 = vrot.lane.b32.xlu0 %v729, 91
    %v888 = vpop.permute.xlu0 %887
    %889 = vrot.lane.b32.xlu0 %v726, 91
    %v890 = vpop.permute.xlu0 %889
    %891 = vrot.lane.b32.xlu0 %v740, 91
    %v892 = vpop.permute.xlu0 %891
    %893 = vrot.lane.b32.xlu0 %v741, 91
    %v894 = vpop.permute.xlu0 %893
    %895 = vrot.lane.b32.xlu0 %v738, 91
    %v896 = vpop.permute.xlu0 %895
    %897 = vrot.lane.b32.xlu0 %v752, 91
    %v898 = vpop.permute.xlu0 %897
    %899 = vrot.lane.b32.xlu0 %v753, 91
    %v900 = vpop.permute.xlu0 %899
    %901 = vrot.lane.b32.xlu0 %v750, 91
    %v902 = vpop.permute.xlu0 %901
    %vm903 = vcmask 744448
    %v904 = vsel %vm903, %v850, %v852
    %v905 = vsel %vm903, %v852, %v854
    %v906 = vsel %vm903, %v856, %v858
    %v907 = vsel %vm903, %v858, %v860
    %v908 = vsel %vm903, %v862, %v864
    %v909 = vsel %vm903, %v864, %v866
    %v910 = vsel %vm903, %v868, %v870
    %v911 = vsel %vm903, %v870, %v872
    %v912 = vsel %vm903, %v874, %v876
    %v913 = vsel %vm903, %v876, %v878
    %v914 = vsel %vm903, %v880, %v882
    %v915 = vsel %vm903, %v882, %v884
    %v916 = vsel %vm903, %v886, %v888
    %v917 = vsel %vm903, %v888, %v890
    %v918 = vsel %vm903, %v892, %v894
    %v919 = vsel %vm903, %v894, %v896
    %v920 = vsel %vm903, %v898, %v900
    %v921 = vsel %vm903, %v900, %v902
    %v949 = vld [vmem:[%s5] sm:$0xff]
    %v950 = vld [vmem:[%s5 + $0x8] sm:$0xff]
    %v951 = vld [vmem:[%s5 + $0x10] sm:$0xff]
    %v952 = vld [vmem:[%s5 + $0x18] sm:$0xff]
    %v953 = vld [vmem:[%s6] sm:$0xff]
    %v954 = vld [vmem:[%s6 + $0x8] sm:$0xff]
    %956 = vset.pattern.permute.xlu0 0
    %957 = vperm.xlu0 %956, %v953
    %v958 = vpop.permute.xlu0 %957
    %961 = vset.pattern.permute.xlu0 0
    %962 = vperm.xlu0 %961, %v954
    %v963 = vpop.permute.xlu0 %962
    %vm965 = vcmask 588800
    %v967 = vsel %vm965, %v950, 0
    %v970 = vsel %vm965, %v952, 0
    %972 = vmatprep.subr.mxu0 %v654
    %973 = vmatpush1.msra.mxu0 %v653
    %974 = vmatprep.subr.mxu0 %v669
    %975 = vmatpush1.msra.mxu0 %v668
    %976 = vmatprep.subr.mxu0 %v681
    %977 = vmatpush1.msra.mxu0 %v680
    %978 = vmatprep.subr.mxu0 %v693
    %979 = vmatpush1.msra.mxu0 %v692
    %980 = vmatprep.subr.mxu0 %v705
    %981 = vmatpush1.msra.mxu0 %v704
    %982 = vmatprep.subr.mxu0 %v717
    %983 = vmatpush1.msra.mxu0 %v716
    %984 = vmatprep.subr.mxu0 %v729
    %985 = vmatpush1.msra.mxu0 %v728
    %986 = vmatprep.subr.mxu0 %v741
    %987 = vmatpush1.msra.mxu0 %v740
    %988 = vmatprep.subr.mxu0 %v753
    %989 = vmatpush1.msra.mxu0 %v752
    %990 = vmatprep.subr.mxu0 %v765
    %991 = vmatpush1.msra.mxu0 %v764
    %992 = vmatprep.subr.mxu0 %v777
    %993 = vmatpush1.msra.mxu0 %v776
    %994 = vmatprep.subr.mxu0 %v789
    %995 = vmatpush1.msra.mxu0 %v788
    %996 = vmatprep.subr.mxu0 %v801
    %997 = vmatpush1.msra.mxu0 %v800
    %998 = vmatprep.subr.mxu0 %v813
    %999 = vmatpush1.msra.mxu0 %v812
    %1000 = vmatprep.subr.mxu0 %v824
    %1001 = vmatpush1.msra.mxu0 %v823
    %1002 = vmatprep.subr.mxu0 %v836
    %1003 = vmatpush1.msra.mxu0 %v835
    %1004 = vmatprep.subr.mxu0 %v905
    %1005 = vmatpush1.msra.mxu0 %v904
    %1006 = vmatprep.subr.mxu0 %v907
    %1007 = vmatpush1.msra.mxu0 %v906
    %1008 = vmatprep.subr.mxu0 %v909
    %1009 = vmatpush1.msra.mxu0 %v908
    %1010 = vmatprep.subr.mxu0 %v911
    %1011 = vmatpush1.msra.mxu0 %v910
    %1012 = vmatprep.subr.mxu0 %v913
    %1013 = vmatpush1.msra.mxu0 %v912
    %1014 = vmatprep.subr.mxu0 %v915
    %1015 = vmatpush1.msra.mxu0 %v914
    %1016 = vmatprep.subr.mxu0 %v917
    %1017 = vmatpush1.msra.mxu0 %v916
    %1018 = vmatprep.subr.mxu0 %v919
    %1019 = vmatpush1.msra.mxu0 %v918
    %1020 = vmatprep.subr.mxu0 %v921
    %1021 = vmatpush1.msra.mxu0 %v920
    %1022 = vmatprep.subr.mxu0 0.0
    %1023 = vmatpush1.msra.mxu0 0.0
    %1024 = vmatprep.subr.mxu0 0.0
    %1025 = vmatpush1.msra.mxu0 0.0
    %1026 = vmatprep.subr.mxu0 0.0
    %1027 = vmatpush1.msra.mxu0 0.0
    %1028 = vmatprep.subr.mxu0 0.0
    %1029 = vmatpush1.msra.mxu0 0.0
    %1030 = vmatprep.subr.mxu0 0.0
    %1031 = vmatpush1.msra.mxu0 0.0
    %1032 = vmatprep.subr.mxu0 0.0
    %1033 = vmatpush1.msra.mxu0 0.0
    %1034 = vmatprep.subr.mxu0 0.0
    %1035 = vmatpush1.msra.mxu0 0.0
    %1036 = vmatprep.mubr.f32.mxu0 %v967
    %1037 = vmatmul.mubr.f32.gmra.mrb[0].mxu0 %v949
    %v1038 = vpop.f32.mrb[0].mxu0
    %v1039 = vadd.f32 %v958, %v1038
    %v1040 = vpop.f32.mrb[0].mxu0
    %v1041 = vadd.f32 %v958, %v1040
    %1042 = vmatprep.mubr.f32.mxu0 %v970
    %1043 = vmatmul.mubr.f32.gmra.mrb[0].mxu0 %v951
    %v1044 = vpop.f32.mrb[0].mxu0
    %v1045 = vadd.f32 %v963, %v1044
    %v1046 = vpop.f32.mrb[0].mxu0
    %v1047 = vadd.f32 %v963, %v1046
    %1048 = vdwg.mxu0
    %1049 = vmatprep.subr.mxu0 0.0
    %1050 = vmatpush1.msra.mxu0 %v657
    %1051 = vmatprep.subr.mxu0 0.0
    %1052 = vmatpush1.msra.mxu0 %v666
    %1053 = vmatprep.subr.mxu0 0.0
    %1054 = vmatpush1.msra.mxu0 %v678
    %1055 = vmatprep.subr.mxu0 0.0
    %1056 = vmatpush1.msra.mxu0 %v690
    %1057 = vmatprep.subr.mxu0 0.0
    %1058 = vmatpush1.msra.mxu0 %v702
    %1059 = vmatprep.subr.mxu0 0.0
    %1060 = vmatpush1.msra.mxu0 %v714
    %1061 = vmatprep.subr.mxu0 0.0
    %1062 = vmatpush1.msra.mxu0 %v726
    %1063 = vmatprep.subr.mxu0 0.0
    %1064 = vmatpush1.msra.mxu0 %v738
    %1065 = vmatprep.subr.mxu0 0.0
    %1066 = vmatpush1.msra.mxu0 %v750
    %1067 = vmatprep.subr.mxu0 0.0
    %1068 = vmatpush1.msra.mxu0 %v762
    %1069 = vmatprep.subr.mxu0 0.0
    %1070 = vmatpush1.msra.mxu0 %v774
    %1071 = vmatprep.subr.mxu0 0.0
    %1072 = vmatpush1.msra.mxu0 %v786
    %1073 = vmatprep.subr.mxu0 0.0
    %1074 = vmatpush1.msra.mxu0 %v798
    %1075 = vmatprep.subr.mxu0 0.0
    %1076 = vmatpush1.msra.mxu0 %v810
    %1077 = vmatprep.subr.mxu0 0.0
    %1078 = vmatpush1.msra.mxu0 %v822
    %1079 = vmatprep.subr.mxu0 0.0
    %1080 = vmatpush1.msra.mxu0 %v833
    %1081 = vmatprep.subr.mxu0 0.0
    %1082 = vmatpush1.msra.mxu0 %v854
    %1083 = vmatprep.subr.mxu0 0.0
    %1084 = vmatpush1.msra.mxu0 %v860
    %1085 = vmatprep.subr.mxu0 0.0
    %1086 = vmatpush1.msra.mxu0 %v866
    %1087 = vmatprep.subr.mxu0 0.0
    %1088 = vmatpush1.msra.mxu0 %v872
    %1089 = vmatprep.subr.mxu0 0.0
    %1090 = vmatpush1.msra.mxu0 %v878
    %1091 = vmatprep.subr.mxu0 0.0
    %1092 = vmatpush1.msra.mxu0 %v884
    %1093 = vmatprep.subr.mxu0 0.0
    %1094 = vmatpush1.msra.mxu0 %v890
    %1095 = vmatprep.subr.mxu0 0.0
    %1096 = vmatpush1.msra.mxu0 %v896
    %1097 = vmatprep.subr.mxu0 0.0
    %1098 = vmatpush1.msra.mxu0 %v902
    %1099 = vmatprep.subr.mxu0 0.0
    %1100 = vmatpush1.msra.mxu0 0.0
    %1101 = vmatprep.subr.mxu0 0.0
    %1102 = vmatpush1.msra.mxu0 0.0
    %1103 = vmatprep.subr.mxu0 0.0
    %1104 = vmatpush1.msra.mxu0 0.0
    %1105 = vmatprep.subr.mxu0 0.0
    %1106 = vmatpush1.msra.mxu0 0.0
    %1107 = vmatprep.subr.mxu0 0.0
    %1108 = vmatpush1.msra.mxu0 0.0
    %1109 = vmatprep.subr.mxu0 0.0
    %1110 = vmatpush1.msra.mxu0 0.0
    %1111 = vmatprep.subr.mxu0 0.0
    %1112 = vmatpush1.msra.mxu0 0.0
    %1113 = vmatprep.mubr.f32.mxu0 %v967
    %1114 = vmatmul.mubr.f32.gmra.mrb[0].mxu0 %v949
    %v1115 = vpop.f32.mrb[0].mxu0
    %v1116 = vadd.f32 %v958, %v1115
    %v1117 = vpop.f32.mrb[0].mxu0
    %1118 = vmatprep.mubr.f32.mxu0 %v970
    %1119 = vmatmul.mubr.f32.gmra.mrb[0].mxu0 %v951
    %v1120 = vpop.f32.mrb[0].mxu0
    %v1121 = vadd.f32 %v963, %v1120
    %v1122 = vpop.f32.mrb[0].mxu0
    %1123 = vdwg.mxu0
    %v1124 = vmax.f32 %v1039, 0.0
    %v1125 = vmax.f32 %v1041, 0.0
    %v1126 = vmax.f32 %v1116, 0.0
    %v1127 = vmax.f32 %v1045, 0.0
    %v1128 = vmax.f32 %v1047, 0.0
    %v1129 = vmax.f32 %v1121, 0.0
    %v1130 = vld [vmem:[%s7] sm:$0xff]
    %v1131 = vld [vmem:[%s7 + $0x8] sm:$0xff]
    %1133 = vset.pattern.permute.xlu0 0
    %1134 = vperm.xlu0 %1133, %v1130
    %v1135 = vpop.permute.xlu0 %1134
    %1138 = vset.pattern.permute.xlu0 0
    %1139 = vperm.xlu0 %1138, %v1131
    %v1140 = vpop.permute.xlu0 %1139
    %v1142 = vmul.f32 %v1124, %v1135
    %v1143 = vmul.f32 %v1125, %v1135
    %v1144 = vmul.f32 %v1126, %v1135
    %v1145 = vmul.f32 %v1127, %v1140
    %v1146 = vmul.f32 %v1128, %v1140
    %v1147 = vmul.f32 %v1129, %v1140
    %v1148 = vld [vmem:[%s8] sm:$0xff]
    %v1149 = vld [vmem:[%s8 + $0x8] sm:$0xff]
    %1151 = vset.pattern.permute.xlu0 0
    %1152 = vperm.xlu0 %1151, %v1148
    %v1153 = vpop.permute.xlu0 %1152
    %1156 = vset.pattern.permute.xlu0 0
    %1157 = vperm.xlu0 %1156, %v1149
    %v1158 = vpop.permute.xlu0 %1157
    %v1160 = vadd.f32 %v1142, %v1153
    %v1161 = vadd.f32 %v1143, %v1153
    %v1162 = vadd.f32 %v1144, %v1153
    %v1163 = vadd.f32 %v1145, %v1158
    %v1164 = vadd.f32 %v1146, %v1158
    %v1165 = vadd.f32 %v1147, %v1158
    %v1166 = vld [vmem:[%s9] sm:$0xff]
    %v1167 = vld [vmem:[%s9 + $0x8] sm:$0xff]
    %v1168 = vld [vmem:[%s9 + $0x10] sm:$0xff]
    %v1169 = vld [vmem:[%s9 + $0x18] sm:$0xff]
    %v1170 = vld [vmem:[%s9 + $0x20] sm:$0xff]
    %v1171 = vld [vmem:[%s9 + $0x28] sm:$0xff]
    %v1172 = vld [vmem:[%s9 + $0x30] sm:$0xff]
    %v1173 = vld [vmem:[%s9 + $0x38] sm:$0xff]
    %v1174 = vld [vmem:[%s9 + $0x40] sm:$0xff]
    %v1175 = vld [vmem:[%s9 + $0x48] sm:$0xff]
    %v1176 = vld [vmem:[%s9 + $0x50] sm:$0xff]
    %v1177 = vld [vmem:[%s9 + $0x58] sm:$0xff]
    %v1178 = vld [vmem:[%s9 + $0x60] sm:$0xff]
    %v1179 = vld [vmem:[%s9 + $0x68] sm:$0xff]
    %v1180 = vld [vmem:[%s9 + $0x70] sm:$0xff]
    %v1181 = vld [vmem:[%s9 + $0x78] sm:$0xff]
    %v1182 = vld [vmem:[%s9 + $0x80] sm:$0xff]
    %v1183 = vld [vmem:[%s9 + $0x88] sm:$0xff]
    %v1184 = vld [vmem:[%s9 + $0x90] sm:$0xff]
    %v1185 = vld [vmem:[%s9 + $0x98] sm:$0xff]
    %v1186 = vld [vmem:[%s9 + $0xa0] sm:$0xff]
    %v1187 = vld [vmem:[%s9 + $0xa8] sm:$0xff]
    %v1188 = vld [vmem:[%s9 + $0xb0] sm:$0xff]
    %v1189 = vld [vmem:[%s9 + $0xb8] sm:$0xff]
    %v1190 = vld [vmem:[%s9 + $0xc0] sm:$0xff]
    %v1191 = vld [vmem:[%s9 + $0xc8] sm:$0xff]
    %v1192 = vld [vmem:[%s9 + $0xd0] sm:$0xff]
    %v1193 = vld [vmem:[%s9 + $0xd8] sm:$0xff]
    %v1194 = vld [vmem:[%s9 + $0xe0] sm:$0xff]
    %v1195 = vld [vmem:[%s9 + $0xe8] sm:$0xff]
    %v1196 = vld [vmem:[%s9 + $0xf0] sm:$0xff]
    %v1197 = vld [vmem:[%s9 + $0xf8] sm:$0xff]
    %v1198 = vld [vmem:[%s9 + $0x100] sm:$0xff]
    %v1199 = vld [vmem:[%s9 + $0x108] sm:$0xff]
    %v1200 = vld [vmem:[%s9 + $0x110] sm:$0xff]
    %v1201 = vld [vmem:[%s9 + $0x118] sm:$0xff]
    %v1203 = vsel %vm656, %v1162, 0
    %v1206 = vsel %vm656, %v1165, 0
    %1208 = vmatprep.subr.mxu0 0.0
    %1209 = vmatpush1.msra.mxu0 %v1166
    %1210 = vmatprep.subr.mxu0 0.0
    %1211 = vmatpush1.msra.mxu0 %v1167
    %1212 = vmatprep.subr.mxu0 0.0
    %1213 = vmatpush1.msra.mxu0 %v1168
    %1214 = vmatprep.subr.mxu0 0.0
    %1215 = vmatpush1.msra.mxu0 %v1169
    %1216 = vmatprep.subr.mxu0 0.0
    %1217 = vmatpush1.msra.mxu0 %v1170
    %1218 = vmatprep.subr.mxu0 0.0
    %1219 = vmatpush1.msra.mxu0 %v1171
    %1220 = vmatprep.subr.mxu0 0.0
    %1221 = vmatpush1.msra.mxu0 %v1172
    %1222 = vmatprep.subr.mxu0 0.0
    %1223 = vmatpush1.msra.mxu0 %v1173
    %1224 = vmatprep.subr.mxu0 0.0
    %1225 = vmatpush1.msra.mxu0 %v1174
    %1226 = vmatprep.subr.mxu0 0.0
    %1227 = vmatpush1.msra.mxu0 %v1175
    %1228 = vmatprep.subr.mxu0 0.0
    %1229 = vmatpush1.msra.mxu0 %v1176
    %1230 = vmatprep.subr.mxu0 0.0
    %1231 = vmatpush1.msra.mxu0 %v1177
    %1232 = vmatprep.subr.mxu0 0.0
    %1233 = vmatpush1.msra.mxu0 %v1178
    %1234 = vmatprep.subr.mxu0 0.0
    %1235 = vmatpush1.msra.mxu0 %v1179
    %1236 = vmatprep.subr.mxu0 0.0
    %1237 = vmatpush1.msra.mxu0 %v1180
    %1238 = vmatprep.subr.mxu0 0.0
    %1239 = vmatpush1.msra.mxu0 %v1181
    %1240 = vmatprep.subr.mxu0 0.0
    %1241 = vmatpush1.msra.mxu0 %v1182
    %1242 = vmatprep.subr.mxu0 0.0
    %1243 = vmatpush1.msra.mxu0 %v1183
    %1244 = vmatprep.subr.mxu0 0.0
    %1245 = vmatpush1.msra.mxu0 %v1184
    %1246 = vmatprep.subr.mxu0 0.0
    %1247 = vmatpush1.msra.mxu0 %v1185
    %1248 = vmatprep.subr.mxu0 0.0
    %1249 = vmatpush1.msra.mxu0 %v1186
    %1250 = vmatprep.subr.mxu0 0.0
    %1251 = vmatpush1.msra.mxu0 %v1187
    %1252 = vmatprep.subr.mxu0 0.0
    %1253 = vmatpush1.msra.mxu0 %v1188
    %1254 = vmatprep.subr.mxu0 0.0
    %1255 = vmatpush1.msra.mxu0 %v1189
    %1256 = vmatprep.subr.mxu0 0.0
    %1257 = vmatpush1.msra.mxu0 %v1190
    %1258 = vmatprep.subr.mxu0 0.0
    %1259 = vmatpush1.msra.mxu0 %v1191
    %1260 = vmatprep.subr.mxu0 0.0
    %1261 = vmatpush1.msra.mxu0 %v1192
    %1262 = vmatprep.subr.mxu0 0.0
    %1263 = vmatpush1.msra.mxu0 %v1193
    %1264 = vmatprep.subr.mxu0 0.0
    %1265 = vmatpush1.msra.mxu0 %v1194
    %1266 = vmatprep.subr.mxu0 0.0
    %1267 = vmatpush1.msra.mxu0 %v1195
    %1268 = vmatprep.subr.mxu0 0.0
    %1269 = vmatpush1.msra.mxu0 %v1196
    %1270 = vmatprep.subr.mxu0 0.0
    %1271 = vmatpush1.msra.mxu0 %v1197
    %1272 = vmatprep.mubr.f32.mxu0 %v1161
    %1273 = vmatmul.mubr.f32.gmra.mrb[0].mxu0 %v1160
    %v1274 = vpop.f32.mrb[0].mxu0
    %v1275 = vadd.f32 0.0, %v1274
    %v1276 = vpop.f32.mrb[0].mxu0
    %1277 = vmatprep.mubr.f32.mxu0 %v1164
    %1278 = vmatmul.mubr.f32.gmra.mrb[0].mxu0 %v1163
    %v1279 = vpop.f32.mrb[0].mxu0
    %v1280 = vadd.f32 0.0, %v1279
    %v1281 = vpop.f32.mrb[0].mxu0
    %1282 = vdwg.mxu0
    %1283 = vmatprep.subr.mxu0 0.0
    %1284 = vmatpush1.msra.mxu0 %v1198
    %1285 = vmatprep.subr.mxu0 0.0
    %1286 = vmatpush1.msra.mxu0 %v1199
    %1287 = vmatprep.subr.mxu0 0.0
    %1288 = vmatpush1.msra.mxu0 %v1200
    %1289 = vmatprep.subr.mxu0 0.0
    %1290 = vmatpush1.msra.mxu0 %v1201
    %1291 = vmatprep.subr.mxu0 0.0
    %1292 = vmatpush1.msra.mxu0 0.0
    %1293 = vmatprep.subr.mxu0 0.0
    %1294 = vmatpush1.msra.mxu0 0.0
    %1295 = vmatprep.subr.mxu0 0.0
    %1296 = vmatpush1.msra.mxu0 0.0
    %1297 = vmatprep.subr.mxu0 0.0
    %1298 = vmatpush1.msra.mxu0 0.0
    %1299 = vmatprep.subr.mxu0 0.0
    %1300 = vmatpush1.msra.mxu0 0.0
    %1301 = vmatprep.subr.mxu0 0.0
    %1302 = vmatpush1.msra.mxu0 0.0
    %1303 = vmatprep.subr.mxu0 0.0
    %1304 = vmatpush1.msra.mxu0 0.0
    %1305 = vmatprep.subr.mxu0 0.0
    %1306 = vmatpush1.msra.mxu0 0.0
    %1307 = vmatprep.subr.mxu0 0.0
    %1308 = vmatpush1.msra.mxu0 0.0
    %1309 = vmatprep.subr.mxu0 0.0
    %1310 = vmatpush1.msra.mxu0 0.0
    %1311 = vmatprep.subr.mxu0 0.0
    %1312 = vmatpush1.msra.mxu0 0.0
    %1313 = vmatprep.subr.mxu0 0.0
    %1314 = vmatpush1.msra.mxu0 0.0
    %1315 = vmatprep.subr.mxu0 0.0
    %1316 = vmatpush1.msra.mxu0 0.0
    %1317 = vmatprep.subr.mxu0 0.0
    %1318 = vmatpush1.msra.mxu0 0.0
    %1319 = vmatprep.subr.mxu0 0.0
    %1320 = vmatpush1.msra.mxu0 0.0
    %1321 = vmatprep.subr.mxu0 0.0
    %1322 = vmatpush1.msra.mxu0 0.0
    %1323 = vmatprep.subr.mxu0 0.0
    %1324 = vmatpush1.msra.mxu0 0.0
    %1325 = vmatprep.subr.mxu0 0.0
    %1326 = vmatpush1.msra.mxu0 0.0
    %1327 = vmatprep.subr.mxu0 0.0
    %1328 = vmatpush1.msra.mxu0 0.0
    %1329 = vmatprep.subr.mxu0 0.0
    %1330 = vmatpush1.msra.mxu0 0.0
    %1331 = vmatprep.subr.mxu0 0.0
    %1332 = vmatpush1.msra.mxu0 0.0
    %1333 = vmatprep.subr.mxu0 0.0
    %1334 = vmatpush1.msra.mxu0 0.0
    %1335 = vmatprep.subr.mxu0 0.0
    %1336 = vmatpush1.msra.mxu0 0.0
    %1337 = vmatprep.subr.mxu0 0.0
    %1338 = vmatpush1.msra.mxu0 0.0
    %1339 = vmatprep.subr.mxu0 0.0
    %1340 = vmatpush1.msra.mxu0 0.0
    %1341 = vmatprep.subr.mxu0 0.0
    %1342 = vmatpush1.msra.mxu0 0.0
    %1343 = vmatprep.subr.mxu0 0.0
    %1344 = vmatpush1.msra.mxu0 0.0
    %1345 = vmatprep.subr.mxu0 0.0
    %1346 = vmatpush1.msra.mxu0 0.0
    %1347 = vmatprep.mubr.f32.mxu0 0.0
    %1348 = vmatmul.mubr.f32.gmra.mrb[0].mxu0 %v1203
    %v1349 = vpop.f32.mrb[0].mxu0
    %v1350 = vadd.f32 %v1275, %v1349
    %v1351 = vpop.f32.mrb[0].mxu0
    %1352 = vmatprep.mubr.f32.mxu0 0.0
    %1353 = vmatmul.mubr.f32.gmra.mrb[0].mxu0 %v1206
    %v1354 = vpop.f32.mrb[0].mxu0
    %v1355 = vadd.f32 %v1280, %v1354
    %v1356 = vpop.f32.mrb[0].mxu0
    %1357 = vdwg.mxu0
    %1360 = vrot.lane.b32.xlu0 %v1350, 96
    %v1361 = vpop.permute.xlu0 %1360
    %1362 = vrot.lane.b32.xlu0 %v1355, 96
    %v1363 = vpop.permute.xlu0 %1362
    %v1366 = vmax.f32 %v1350, %v1361
    %v1367 = vmax.f32 %v1355, %v1363
    %1370 = vrot.lane.b32.xlu0 %v1366, 64
    %v1371 = vpop.permute.xlu0 %1370
    %1372 = vrot.lane.b32.xlu0 %v1367, 64
    %v1373 = vpop.permute.xlu0 %1372
    %v1376 = vmax.f32 %v1366, %v1371
    %v1377 = vmax.f32 %v1367, %v1373
    %v1379 = vrot.slane %v1376, 1
    %1380 = vrot.lane.b32.xlu0 %v1379, 16
    %v1381 = vpop.permute.xlu0 %1380
    %v1383 = vrot.slane %v1376, 2
    %1384 = vrot.lane.b32.xlu0 %v1383, 32
    %v1385 = vpop.permute.xlu0 %1384
    %v1387 = vrot.slane %v1376, 3
    %1388 = vrot.lane.b32.xlu0 %v1387, 48
    %v1389 = vpop.permute.xlu0 %1388
    %v1391 = vrot.slane %v1376, 4
    %1392 = vrot.lane.b32.xlu0 %v1391, 64
    %v1393 = vpop.permute.xlu0 %1392
    %v1395 = vrot.slane %v1376, 5
    %1396 = vrot.lane.b32.xlu0 %v1395, 80
    %v1397 = vpop.permute.xlu0 %1396
    %v1399 = vrot.slane %v1376, 6
    %1400 = vrot.lane.b32.xlu0 %v1399, 96
    %v1401 = vpop.permute.xlu0 %1400
    %v1403 = vrot.slane %v1376, 7
    %1404 = vrot.lane.b32.xlu0 %v1403, 112
    %v1405 = vpop.permute.xlu0 %1404
    %v1408 = vrot.slane %v1377, 1
    %1409 = vrot.lane.b32.xlu0 %v1408, 16
    %v1410 = vpop.permute.xlu0 %1409
    %v1412 = vrot.slane %v1377, 2
    %1413 = vrot.lane.b32.xlu0 %v1412, 32
    %v1414 = vpop.permute.xlu0 %1413
    %v1416 = vrot.slane %v1377, 3
    %1417 = vrot.lane.b32.xlu0 %v1416, 48
    %v1418 = vpop.permute.xlu0 %1417
    %v1420 = vrot.slane %v1377, 4
    %1421 = vrot.lane.b32.xlu0 %v1420, 64
    %v1422 = vpop.permute.xlu0 %1421
    %v1424 = vrot.slane %v1377, 5
    %1425 = vrot.lane.b32.xlu0 %v1424, 80
    %v1426 = vpop.permute.xlu0 %1425
    %v1428 = vrot.slane %v1377, 6
    %1429 = vrot.lane.b32.xlu0 %v1428, 96
    %v1430 = vpop.permute.xlu0 %1429
    %v1432 = vrot.slane %v1377, 7
    %1433 = vrot.lane.b32.xlu0 %v1432, 112
    %v1434 = vpop.permute.xlu0 %1433
    %vm1436 = vcmask 130048
    %v1437 = vsel %vm1436, %v1376, %v1381
    %v1438 = vsel %vm656, %v1437, %v1385
    %vm1439 = vcmask 392192
    %v1440 = vsel %vm1439, %v1438, %v1389
    %v1441 = vsel %vm647, %v1440, %v1393
    %vm1442 = vcmask 654336
    %v1443 = vsel %vm1442, %v1441, %v1397
    %v1444 = vsel %vm612, %v1443, %v1401
    %v1445 = vsel %vm763, %v1444, %v1405
    %v1446 = vsel %vm1436, %v1377, %v1410
    %v1447 = vsel %vm656, %v1446, %v1414
    %v1448 = vsel %vm1439, %v1447, %v1418
    %v1449 = vsel %vm647, %v1448, %v1422
    %v1450 = vsel %vm1442, %v1449, %v1426
    %v1451 = vsel %vm612, %v1450, %v1430
    %v1452 = vsel %vm763, %v1451, %v1434
    %1453 = vrot.lane.b32.xlu0 %v1376, 112
    %v1454 = vpop.permute.xlu0 %1453
    %1457 = vrot.lane.b32.xlu0 %v1383, 16
    %v1458 = vpop.permute.xlu0 %1457
    %1460 = vrot.lane.b32.xlu0 %v1387, 32
    %v1461 = vpop.permute.xlu0 %1460
    %1463 = vrot.lane.b32.xlu0 %v1391, 48
    %v1464 = vpop.permute.xlu0 %1463
    %1466 = vrot.lane.b32.xlu0 %v1395, 64
    %v1467 = vpop.permute.xlu0 %1466
    %1469 = vrot.lane.b32.xlu0 %v1399, 80
    %v1470 = vpop.permute.xlu0 %1469
    %1472 = vrot.lane.b32.xlu0 %v1403, 96
    %v1473 = vpop.permute.xlu0 %1472
    %1475 = vrot.lane.b32.xlu0 %v1377, 112
    %v1476 = vpop.permute.xlu0 %1475
    %1479 = vrot.lane.b32.xlu0 %v1412, 16
    %v1480 = vpop.permute.xlu0 %1479
    %1482 = vrot.lane.b32.xlu0 %v1416, 32
    %v1483 = vpop.permute.xlu0 %1482
    %1485 = vrot.lane.b32.xlu0 %v1420, 48
    %v1486 = vpop.permute.xlu0 %1485
    %1488 = vrot.lane.b32.xlu0 %v1424, 64
    %v1489 = vpop.permute.xlu0 %1488
    %1491 = vrot.lane.b32.xlu0 %v1428, 80
    %v1492 = vpop.permute.xlu0 %1491
    %1494 = vrot.lane.b32.xlu0 %v1432, 96
    %v1495 = vpop.permute.xlu0 %1494
    %v1497 = vsel %vm1436, %v1454, %v1379
    %v1498 = vsel %vm656, %v1497, %v1458
    %v1499 = vsel %vm1439, %v1498, %v1461
    %v1500 = vsel %vm647, %v1499, %v1464
    %v1501 = vsel %vm1442, %v1500, %v1467
    %v1502 = vsel %vm612, %v1501, %v1470
    %v1503 = vsel %vm763, %v1502, %v1473
    %v1504 = vsel %vm1436, %v1476, %v1408
    %v1505 = vsel %vm656, %v1504, %v1480
    %v1506 = vsel %vm1439, %v1505, %v1483
    %v1507 = vsel %vm647, %v1506, %v1486
    %v1508 = vsel %vm1442, %v1507, %v1489
    %v1509 = vsel %vm612, %v1508, %v1492
    %v1510 = vsel %vm763, %v1509, %v1495
    %v1513 = vrot.slane %v1503, 7
    %v1514 = vrot.slane %v1510, 7
    %vm1517 = vcmask 1040384
    %v1518 = vsel %vm1517, %v1445, %v1513
    %v1519 = vsel %vm1517, %v1452, %v1514
    %v1520 = vld [vmem:[%s10] sm:$0xff]
    %v1521 = vld [vmem:[%s10 + $0x8] sm:$0xff]
    %v1522 = vld [vmem:[%s10 + $0x10] sm:$0xff]
    %v1523 = vld [vmem:[%s10 + $0x18] sm:$0xff]
    %v1524 = vld [vmem:[%s10 + $0x20] sm:$0xff]
    %v1525 = vld [vmem:[%s10 + $0x28] sm:$0xff]
    %v1526 = vld [vmem:[%s10 + $0x30] sm:$0xff]
    %v1527 = vld [vmem:[%s10 + $0x38] sm:$0xff]
    %v1528 = vld [vmem:[%s10 + $0x40] sm:$0xff]
    %v1529 = vld [vmem:[%s10 + $0x48] sm:$0xff]
    %v1530 = vld [vmem:[%s10 + $0x50] sm:$0xff]
    %v1531 = vld [vmem:[%s10 + $0x58] sm:$0xff]
    %v1532 = vld [vmem:[%s10 + $0x60] sm:$0xff]
    %v1533 = vld [vmem:[%s10 + $0x68] sm:$0xff]
    %v1534 = vld [vmem:[%s10 + $0x70] sm:$0xff]
    %v1535 = vld [vmem:[%s10 + $0x78] sm:$0xff]
    %v1536 = vld [vmem:[%s10 + $0x80] sm:$0xff]
    %v1537 = vld [vmem:[%s10 + $0x88] sm:$0xff]
    %v1538 = vld [vmem:[%s10 + $0x90] sm:$0xff]
    %v1539 = vld [vmem:[%s10 + $0x98] sm:$0xff]
    %v1540 = vld [vmem:[%s10 + $0xa0] sm:$0xff]
    %v1541 = vld [vmem:[%s10 + $0xa8] sm:$0xff]
    %v1542 = vld [vmem:[%s10 + $0xb0] sm:$0xff]
    %v1543 = vld [vmem:[%s10 + $0xb8] sm:$0xff]
    %v1544 = vld [vmem:[%s10 + $0xc0] sm:$0xff]
    %v1545 = vld [vmem:[%s10 + $0xc8] sm:$0xff]
    %v1546 = vld [vmem:[%s10 + $0xd0] sm:$0xff]
    %v1547 = vld [vmem:[%s10 + $0xd8] sm:$0xff]
    %v1548 = vld [vmem:[%s10 + $0xe0] sm:$0xff]
    %v1549 = vld [vmem:[%s10 + $0xe8] sm:$0xff]
    %v1550 = vld [vmem:[%s10 + $0xf0] sm:$0xff]
    %v1551 = vld [vmem:[%s10 + $0xf8] sm:$0xff]
    %v1552 = vld [vmem:[%s11] sm:$0x1]
    %v1554 = vlaneseq
    %v1555 = vshrl.u32 %v1554, 7
    %v1556 = vsub.s32 0, %v1555
    %v1557 = vrot.slane %v1552, %v1556
    %1559 = vmatprep.subr.mxu0 0.0
    %1560 = vmatpush1.msra.mxu0 %v1520
    %1561 = vmatprep.subr.mxu0 0.0
    %1562 = vmatpush1.msra.mxu0 %v1521
    %1563 = vmatprep.subr.mxu0 0.0
    %1564 = vmatpush1.msra.mxu0 %v1522
    %1565 = vmatprep.subr.mxu0 0.0
    %1566 = vmatpush1.msra.mxu0 %v1523
    %1567 = vmatprep.subr.mxu0 0.0
    %1568 = vmatpush1.msra.mxu0 %v1524
    %1569 = vmatprep.subr.mxu0 0.0
    %1570 = vmatpush1.msra.mxu0 %v1525
    %1571 = vmatprep.subr.mxu0 0.0
    %1572 = vmatpush1.msra.mxu0 %v1526
    %1573 = vmatprep.subr.mxu0 0.0
    %1574 = vmatpush1.msra.mxu0 %v1527
    %1575 = vmatprep.subr.mxu0 0.0
    %1576 = vmatpush1.msra.mxu0 %v1528
    %1577 = vmatprep.subr.mxu0 0.0
    %1578 = vmatpush1.msra.mxu0 %v1529
    %1579 = vmatprep.subr.mxu0 0.0
    %1580 = vmatpush1.msra.mxu0 %v1530
    %1581 = vmatprep.subr.mxu0 0.0
    %1582 = vmatpush1.msra.mxu0 %v1531
    %1583 = vmatprep.subr.mxu0 0.0
    %1584 = vmatpush1.msra.mxu0 %v1532
    %1585 = vmatprep.subr.mxu0 0.0
    %1586 = vmatpush1.msra.mxu0 %v1533
    %1587 = vmatprep.subr.mxu0 0.0
    %1588 = vmatpush1.msra.mxu0 %v1534
    %1589 = vmatprep.subr.mxu0 0.0
    %1590 = vmatpush1.msra.mxu0 %v1535
    %1591 = vmatprep.subr.mxu0 0.0
    %1592 = vmatpush1.msra.mxu0 %v1536
    %1593 = vmatprep.subr.mxu0 0.0
    %1594 = vmatpush1.msra.mxu0 %v1537
    %1595 = vmatprep.subr.mxu0 0.0
    %1596 = vmatpush1.msra.mxu0 %v1538
    %1597 = vmatprep.subr.mxu0 0.0
    %1598 = vmatpush1.msra.mxu0 %v1539
    %1599 = vmatprep.subr.mxu0 0.0
    %1600 = vmatpush1.msra.mxu0 %v1540
    %1601 = vmatprep.subr.mxu0 0.0
    %1602 = vmatpush1.msra.mxu0 %v1541
    %1603 = vmatprep.subr.mxu0 0.0
    %1604 = vmatpush1.msra.mxu0 %v1542
    %1605 = vmatprep.subr.mxu0 0.0
    %1606 = vmatpush1.msra.mxu0 %v1543
    %1607 = vmatprep.subr.mxu0 0.0
    %1608 = vmatpush1.msra.mxu0 %v1544
    %1609 = vmatprep.subr.mxu0 0.0
    %1610 = vmatpush1.msra.mxu0 %v1545
    %1611 = vmatprep.subr.mxu0 0.0
    %1612 = vmatpush1.msra.mxu0 %v1546
    %1613 = vmatprep.subr.mxu0 0.0
    %1614 = vmatpush1.msra.mxu0 %v1547
    %1615 = vmatprep.subr.mxu0 0.0
    %1616 = vmatpush1.msra.mxu0 %v1548
    %1617 = vmatprep.subr.mxu0 0.0
    %1618 = vmatpush1.msra.mxu0 %v1549
    %1619 = vmatprep.subr.mxu0 0.0
    %1620 = vmatpush1.msra.mxu0 %v1550
    %1621 = vmatprep.subr.mxu0 0.0
    %1622 = vmatpush1.msra.mxu0 %v1551
    %1623 = vmatprep.mubr.f32.mxu0 %v1519
    %1624 = vmatmul.mubr.f32.gmra.mrb[0].mxu0 %v1518
    %v1625 = vpop.f32.mrb[0].mxu0
    %v1626 = vadd.f32 %v1557, %v1625
    %v1627 = vpop.f32.mrb[0].mxu0
    %1628 = vdwg.mxu0
    %v1629 = vmax.f32 %v1626, 0.0
    %v1630 = vld [vmem:[%s12] sm:$0xff]
    %v1631 = vld [vmem:[%s12 + $0x8] sm:$0xff]
    %v1632 = vld [vmem:[%s12 + $0x10] sm:$0xff]
    %v1633 = vld [vmem:[%s12 + $0x18] sm:$0xff]
    %v1634 = vld [vmem:[%s12 + $0x20] sm:$0xff]
    %v1635 = vld [vmem:[%s12 + $0x28] sm:$0xff]
    %v1636 = vld [vmem:[%s12 + $0x30] sm:$0xff]
    %v1637 = vld [vmem:[%s12 + $0x38] sm:$0xff]
    %v1638 = vld [vmem:[%s12 + $0x40] sm:$0xff]
    %v1639 = vld [vmem:[%s12 + $0x48] sm:$0xff]
    %v1640 = vld [vmem:[%s12 + $0x50] sm:$0xff]
    %v1641 = vld [vmem:[%s12 + $0x58] sm:$0xff]
    %v1642 = vld [vmem:[%s12 + $0x60] sm:$0xff]
    %v1643 = vld [vmem:[%s12 + $0x68] sm:$0xff]
    %v1644 = vld [vmem:[%s12 + $0x70] sm:$0xff]
    %v1645 = vld [vmem:[%s12 + $0x78] sm:$0xff]
    %v1646 = vld [vmem:[%s13] sm:$0x1]
    %v1648 = vlaneseq
    %v1649 = vshrl.u32 %v1648, 7
    %v1650 = vsub.s32 0, %v1649
    %v1651 = vrot.slane %v1646, %v1650
    %1653 = vmatprep.subr.mxu0 0.0
    %1654 = vmatpush1.msra.mxu0 %v1630
    %1655 = vmatprep.subr.mxu0 0.0
    %1656 = vmatpush1.msra.mxu0 %v1631
    %1657 = vmatprep.subr.mxu0 0.0
    %1658 = vmatpush1.msra.mxu0 %v1632
    %1659 = vmatprep.subr.mxu0 0.0
    %1660 = vmatpush1.msra.mxu0 %v1633
    %1661 = vmatprep.subr.mxu0 0.0
    %1662 = vmatpush1.msra.mxu0 %v1634
    %1663 = vmatprep.subr.mxu0 0.0
    %1664 = vmatpush1.msra.mxu0 %v1635
    %1665 = vmatprep.subr.mxu0 0.0
    %1666 = vmatpush1.msra.mxu0 %v1636
    %1667 = vmatprep.subr.mxu0 0.0
    %1668 = vmatpush1.msra.mxu0 %v1637
    %1669 = vmatprep.subr.mxu0 0.0
    %1670 = vmatpush1.msra.mxu0 %v1638
    %1671 = vmatprep.subr.mxu0 0.0
    %1672 = vmatpush1.msra.mxu0 %v1639
    %1673 = vmatprep.subr.mxu0 0.0
    %1674 = vmatpush1.msra.mxu0 %v1640
    %1675 = vmatprep.subr.mxu0 0.0
    %1676 = vmatpush1.msra.mxu0 %v1641
    %1677 = vmatprep.subr.mxu0 0.0
    %1678 = vmatpush1.msra.mxu0 %v1642
    %1679 = vmatprep.subr.mxu0 0.0
    %1680 = vmatpush1.msra.mxu0 %v1643
    %1681 = vmatprep.subr.mxu0 0.0
    %1682 = vmatpush1.msra.mxu0 %v1644
    %1683 = vmatprep.subr.mxu0 0.0
    %1684 = vmatpush1.msra.mxu0 %v1645
    %1685 = vmatprep.subr.mxu0 0.0
    %1686 = vmatpush1.msra.mxu0 0.0
    %1687 = vmatprep.subr.mxu0 0.0
    %1688 = vmatpush1.msra.mxu0 0.0
    %1689 = vmatprep.subr.mxu0 0.0
    %1690 = vmatpush1.msra.mxu0 0.0
    %1691 = vmatprep.subr.mxu0 0.0
    %1692 = vmatpush1.msra.mxu0 0.0
    %1693 = vmatprep.subr.mxu0 0.0
    %1694 = vmatpush1.msra.mxu0 0.0
    %1695 = vmatprep.subr.mxu0 0.0
    %1696 = vmatpush1.msra.mxu0 0.0
    %1697 = vmatprep.subr.mxu0 0.0
    %1698 = vmatpush1.msra.mxu0 0.0
    %1699 = vmatprep.subr.mxu0 0.0
    %1700 = vmatpush1.msra.mxu0 0.0
    %1701 = vmatprep.subr.mxu0 0.0
    %1702 = vmatpush1.msra.mxu0 0.0
    %1703 = vmatprep.subr.mxu0 0.0
    %1704 = vmatpush1.msra.mxu0 0.0
    %1705 = vmatprep.subr.mxu0 0.0
    %1706 = vmatpush1.msra.mxu0 0.0
    %1707 = vmatprep.subr.mxu0 0.0
    %1708 = vmatpush1.msra.mxu0 0.0
    %1709 = vmatprep.subr.mxu0 0.0
    %1710 = vmatpush1.msra.mxu0 0.0
    %1711 = vmatprep.subr.mxu0 0.0
    %1712 = vmatpush1.msra.mxu0 0.0
    %1713 = vmatprep.subr.mxu0 0.0
    %1714 = vmatpush1.msra.mxu0 0.0
    %1715 = vmatprep.subr.mxu0 0.0
    %1716 = vmatpush1.msra.mxu0 0.0
    %1717 = vmatprep.mubr.f32.mxu0 0.0
    %1718 = vmatmul.mubr.f32.gmra.mrb[0].mxu0 %v1629
    %v1719 = vpop.f32.mrb[0].mxu0
    %v1720 = vadd.f32 %v1651, %v1719
    %v1721 = vpop.f32.mrb[0].mxu0
    %1722 = vdwg.mxu0
    %v1723 = vmax.f32 %v1720, 0.0
    %v1724 = vld [vmem:[%s14] sm:$0xff]
    %v1725 = vld [vmem:[%s14 + $0x8] sm:$0xff]
    %v1726 = vld [vmem:[%s14 + $0x10] sm:$0xff]
    %v1727 = vld [vmem:[%s14 + $0x18] sm:$0xff]
    %v1728 = vld [vmem:[%s14 + $0x20] sm:$0xff]
    %v1729 = vld [vmem:[%s14 + $0x28] sm:$0xff]
    %v1730 = vld [vmem:[%s14 + $0x30] sm:$0xff]
    %v1731 = vld [vmem:[%s14 + $0x38] sm:$0xff]
    %v1732 = vld [vmem:[%s14 + $0x40] sm:$0xff]
    %v1733 = vld [vmem:[%s14 + $0x48] sm:$0xff]
    %v1734 = vld [vmem:[%s14 + $0x50] sm:$0xff]
    %v1735 = vld [vmem:[%s14 + $0x58] sm:$0xff]
    %v1736 = vld [vmem:[%s14 + $0x60] sm:$0xff]
    %v1737 = vld [vmem:[%s14 + $0x68] sm:$0xff]
    %v1738 = vld [vmem:[%s14 + $0x70] sm:$0xff]
    %v1739 = vld [vmem:[%s14 + $0x78] sm:$0xff]
    %v1740 = vld [vmem:[%s15] sm:$0x1]
    %v1742 = vlaneseq
    %v1743 = vshrl.u32 %v1742, 7
    %v1744 = vsub.s32 0, %v1743
    %v1745 = vrot.slane %v1740, %v1744
    %1747 = vmatprep.subr.mxu0 0.0
    %1748 = vmatpush1.msra.mxu0 %v1724
    %1749 = vmatprep.subr.mxu0 0.0
    %1750 = vmatpush1.msra.mxu0 %v1725
    %1751 = vmatprep.subr.mxu0 0.0
    %1752 = vmatpush1.msra.mxu0 %v1726
    %1753 = vmatprep.subr.mxu0 0.0
    %1754 = vmatpush1.msra.mxu0 %v1727
    %1755 = vmatprep.subr.mxu0 0.0
    %1756 = vmatpush1.msra.mxu0 %v1728
    %1757 = vmatprep.subr.mxu0 0.0
    %1758 = vmatpush1.msra.mxu0 %v1729
    %1759 = vmatprep.subr.mxu0 0.0
    %1760 = vmatpush1.msra.mxu0 %v1730
    %1761 = vmatprep.subr.mxu0 0.0
    %1762 = vmatpush1.msra.mxu0 %v1731
    %1763 = vmatprep.subr.mxu0 0.0
    %1764 = vmatpush1.msra.mxu0 %v1732
    %1765 = vmatprep.subr.mxu0 0.0
    %1766 = vmatpush1.msra.mxu0 %v1733
    %1767 = vmatprep.subr.mxu0 0.0
    %1768 = vmatpush1.msra.mxu0 %v1734
    %1769 = vmatprep.subr.mxu0 0.0
    %1770 = vmatpush1.msra.mxu0 %v1735
    %1771 = vmatprep.subr.mxu0 0.0
    %1772 = vmatpush1.msra.mxu0 %v1736
    %1773 = vmatprep.subr.mxu0 0.0
    %1774 = vmatpush1.msra.mxu0 %v1737
    %1775 = vmatprep.subr.mxu0 0.0
    %1776 = vmatpush1.msra.mxu0 %v1738
    %1777 = vmatprep.subr.mxu0 0.0
    %1778 = vmatpush1.msra.mxu0 %v1739
    %1779 = vmatprep.subr.mxu0 0.0
    %1780 = vmatpush1.msra.mxu0 0.0
    %1781 = vmatprep.subr.mxu0 0.0
    %1782 = vmatpush1.msra.mxu0 0.0
    %1783 = vmatprep.subr.mxu0 0.0
    %1784 = vmatpush1.msra.mxu0 0.0
    %1785 = vmatprep.subr.mxu0 0.0
    %1786 = vmatpush1.msra.mxu0 0.0
    %1787 = vmatprep.subr.mxu0 0.0
    %1788 = vmatpush1.msra.mxu0 0.0
    %1789 = vmatprep.subr.mxu0 0.0
    %1790 = vmatpush1.msra.mxu0 0.0
    %1791 = vmatprep.subr.mxu0 0.0
    %1792 = vmatpush1.msra.mxu0 0.0
    %1793 = vmatprep.subr.mxu0 0.0
    %1794 = vmatpush1.msra.mxu0 0.0
    %1795 = vmatprep.subr.mxu0 0.0
    %1796 = vmatpush1.msra.mxu0 0.0
    %1797 = vmatprep.subr.mxu0 0.0
    %1798 = vmatpush1.msra.mxu0 0.0
    %1799 = vmatprep.subr.mxu0 0.0
    %1800 = vmatpush1.msra.mxu0 0.0
    %1801 = vmatprep.subr.mxu0 0.0
    %1802 = vmatpush1.msra.mxu0 0.0
    %1803 = vmatprep.subr.mxu0 0.0
    %1804 = vmatpush1.msra.mxu0 0.0
    %1805 = vmatprep.subr.mxu0 0.0
    %1806 = vmatpush1.msra.mxu0 0.0
    %1807 = vmatprep.subr.mxu0 0.0
    %1808 = vmatpush1.msra.mxu0 0.0
    %1809 = vmatprep.subr.mxu0 0.0
    %1810 = vmatpush1.msra.mxu0 0.0
    %1811 = vmatprep.mubr.f32.mxu0 0.0
    %1812 = vmatmul.mubr.f32.gmra.mrb[0].mxu0 %v1723
    %v1813 = vpop.f32.mrb[0].mxu0
    %v1814 = vadd.f32 %v1745, %v1813
    %v1815 = vpop.f32.mrb[0].mxu0
    %1816 = vdwg.mxu0
    %vm1817 = vcmask 1041408
    %v1818 = vsel %vm1817, %v1814, -inf
    %1819 = vmax.xlane.f32.xlu0 %v1818
    %v1820 = vpop.xlane.xlu0 %1819
    %v1821 = vsub.f32 %v1814, %v1820
    %v1822 = vmul.f32 %v1821, 1.442695
    %v1823 = vpow.pop %v1822
    %v1824 = vsel %vm1817, %v1823, 0.0
    %1825 = vadd.xlane.f32.xlu0 %v1824
    %v1826 = vpop.xlane.xlu0 %1825
    %v1827 = vrcp.pop %v1826
    %v1828 = vmul.f32 %v1823, %v1827
    %1829 = vst [vmem:[#allocation2] sm:$0x3] %v1828
    // Predicated region
    $region66: #{simple_cnn_forward.1} parent=1 // pred_check
      _
    $region67: #{simple_cnn_forward.1} parent=1 // pred_check_branch
      %1831 = sbr.rel (0) target = $region69
    $region68: #{simple_cnn_forward.1} parent=1 // pred_region
      %s1833 = ssub.s32 32, 32
      %1834 = vsyncadd [#allocation3], %s1833
      %s1836 = sshll.u32 [#allocation2], 4
      %s1837 = int_to_ptr.vmem [resolvable:$true] %s1836
      %1839 = dma.vmem_to_hbm [thread:$0]  %s1837, 32, %s16, [#allocation3]
    $region69: #{simple_cnn_forward.1} parent=1 // pred_fallthru
      _
    // Predicated region
    $region70: #{simple_cnn_forward.1} parent=1 // pred_check
      _
    $region71: #{simple_cnn_forward.1} parent=1 // pred_check_branch
      %1841 = sbr.rel (0) target = $region73
    $region72: #{simple_cnn_forward.1} parent=1 // pred_region
      %1842 = dma.done [#allocation3], 32
    $region73: #{simple_cnn_forward.1} parent=1 // pred_fallthru
      _
    %1843 = vsyncpa [#allocation3], 1

</llo_original>
